<compile_context>
chip_gen: v5e
topology: v5e:2x2
jax: 0.10.0
libtpu: 0.0.40
codegen_flags: <defaults>
</compile_context>

<pallas_src>
import functools

import jax
import jax.numpy as jnp
from jax.experimental import pallas as pl
from jax.experimental.pallas import tpu as pltpu

LANE = 128  # TPU lane width; all channel dims are padded to a multiple of this


def _round_up(x, m):
    return (x + m - 1) // m * m


# ----------------------------- Pallas kernel --------------------------------
def gin_kernel(adj_ref, x_ref,
               w1a_ref, b1a_ref, w1b_ref, b1b_ref,
               w2a_ref, b2a_ref, w2b_ref, b2b_ref,
               wl1_ref, bl1_ref, wl2_ref, bl2_ref,
               out_ref, *, out_ch):
    adj = adj_ref[0]                        # [N, N]  bf16, already == A + I
    x = x_ref[0]                            # [N, Cp] bf16 (channel-padded)

    def mlp(h_f32, wa_ref, ba_ref, wb_ref, bb_ref):
        # Linear(+folded BN) -> ReLU -> Linear -> ReLU   (weights are bf16)
        t = jnp.dot(h_f32.astype(jnp.bfloat16), wa_ref[...],
                    preferred_element_type=jnp.float32) + ba_ref[...]
        t = jnp.maximum(t, 0.0)
        t = jnp.dot(t.astype(jnp.bfloat16), wb_ref[...],
                    preferred_element_type=jnp.float32) + bb_ref[...]
        return jnp.maximum(t, 0.0)

    # ---- conv1: nn((A+I) @ x); outer ReLU is a no-op (MLP ends with ReLU),
    #      dropout is identity in eval mode.
    agg1 = jnp.dot(adj, x, preferred_element_type=jnp.float32)
    x1 = mlp(agg1, w1a_ref, b1a_ref, w1b_ref, b1b_ref)

    # ---- conv2
    agg2 = jnp.dot(adj, x1.astype(jnp.bfloat16),
                   preferred_element_type=jnp.float32)
    x2 = mlp(agg2, w2a_ref, b2a_ref, w2b_ref, b2b_ref)

    # ---- head: relu(lin1) -> (dropout identity) -> lin2
    h = jnp.dot(x2.astype(jnp.bfloat16), wl1_ref[...],
                preferred_element_type=jnp.float32) + bl1_ref[...]
    h = jnp.maximum(h, 0.0)
    logits = jnp.dot(h.astype(jnp.bfloat16), wl2_ref[...],
                     preferred_element_type=jnp.float32) + bl2_ref[...]

    # masked, max-stabilized log_softmax over the real (unpadded) classes only
    lane = jax.lax.broadcasted_iota(jnp.int32, logits.shape, 1)
    valid = lane < out_ch
    logits = jnp.where(valid, logits, -1e30)
    m = jnp.max(logits, axis=1, keepdims=True)
    z = logits - m
    lse = jnp.log(jnp.sum(jnp.where(valid, jnp.exp(z), 0.0),
                          axis=1, keepdims=True))
    out_ref[0] = jnp.where(valid, z - lse, 0.0)


# ------------------------------ JAX wrapper ----------------------------------
def gin_forward(adj_b, x_b, p, *, out_ch):
    """adj_b: [B,N,N] bf16 (= A+I per graph); x_b: [B,N,Cpad] bf16."""
    B, N, _ = adj_b.shape
    C = x_b.shape[-1]
    O = p["wl2"].shape[1]                   # padded output lanes (128)

    def batched(shape):
        return pl.BlockSpec((1,) + shape, lambda b: (b, 0, 0))

    def resident(arr):
        # same block every grid step -> weights stay VMEM-resident across B
        return pl.BlockSpec(arr.shape, lambda b: (0, 0))

    in_specs = [
        batched((N, N)),                    # A + I
        batched((N, C)),                    # x
        resident(p["w1a"]), resident(p["b1a"]),
        resident(p["w1b"]), resident(p["b1b"]),
        resident(p["w2a"]), resident(p["b2a"]),
        resident(p["w2b"]), resident(p["b2b"]),
        resident(p["wl1"]), resident(p["bl1"]),
        resident(p["wl2"]), resident(p["bl2"]),
    ]
    out_spec = pl.BlockSpec((1, N, O), lambda b: (b, 0, 0))

    out_padded = pl.pallas_call(
        functools.partial(gin_kernel, out_ch=out_ch),
        out_shape=jax.ShapeDtypeStruct((B, N, O), jnp.float32),
        grid=(B,),
        in_specs=in_specs,
        out_specs=out_spec,
        compiler_params=pltpu.CompilerParams(
            dimension_semantics=("parallel",),       # shard graphs over cores
            vmem_limit_bytes=32 * 1024 * 1024,       # explicit scoped-VMEM cap
        ),
    )(adj_b, x_b,
      p["w1a"], p["b1a"], p["w1b"], p["b1b"],
      p["w2a"], p["b2a"], p["w2b"], p["b2b"],
      p["wl1"], p["bl1"], p["wl2"], p["bl2"])

    return out_padded[:, :, :out_ch]        # drop padded class lanes


# --------------------------- parameter / data setup --------------------------
def init_params(key, input_channels, hidden_channels, output_channels):
    """Raw (PyTorch-like) f32 params incl. eval-mode BN running stats."""
    ks = jax.random.split(key, 8)

    def lin(k, fan_in, fan_out):
        bound = 1.0 / jnp.sqrt(jnp.float32(fan_in))
        kw, kb = jax.random.split(k)
        w = jax.random.uniform(kw, (fan_in, fan_out), jnp.float32, -bound, bound)
        b = jax.random.uniform(kb, (1, fan_out), jnp.float32, -bound, bound)
        return w, b

    def bn(k, c):
        kg, kb, km, kv = jax.random.split(k, 4)
        gamma = 1.0 + 0.1 * jax.random.normal(kg, (1, c), jnp.float32)
        beta = 0.1 * jax.random.normal(kb, (1, c), jnp.float32)
        rmean = 0.1 * jax.random.normal(km, (1, c), jnp.float32)
        rvar = jnp.abs(1.0 + 0.1 * jax.random.normal(kv, (1, c), jnp.float32))
        scale = gamma / jnp.sqrt(rvar + 1e-5)
        shift = beta - rmean * scale
        return scale, shift

    p = {}
    p["w1a"], p["b1a"] = lin(ks[0], input_channels, hidden_channels)
    p["bn1s"], p["bn1b"] = bn(ks[1], hidden_channels)
    p["w1b"], p["b1b"] = lin(ks[2], hidden_channels, hidden_channels)

    p["w2a"], p["b2a"] = lin(ks[3], hidden_channels, hidden_channels)
    p["bn2s"], p["bn2b"] = bn(ks[4], hidden_channels)
    p["w2b"], p["b2b"] = lin(ks[5], hidden_channels, hidden_channels)

    p["wl1"], p["bl1"] = lin(ks[6], hidden_channels, hidden_channels)
    p["wl2"], p["bl2"] = lin(ks[7], hidden_channels, output_channels)
    return p


def prepare_params(raw):
    """Fold BN, pad channel dims to 128 lanes, cast weights to bf16."""
    def fold(w, b, scale, shift):
        return w * scale, b * scale + shift

    w1a, b1a = fold(raw["w1a"], raw["b1a"], raw["bn1s"], raw["bn1b"])
    w2a, b2a = fold(raw["w2a"], raw["b2a"], raw["bn2s"], raw["bn2b"])

    def pad_w(w):
        r = _round_up(w.shape[0], LANE)
        c = _round_up(w.shape[1], LANE)
        return jnp.pad(w, ((0, r - w.shape[0]), (0, c - w.shape[1]))
                       ).astype(jnp.bfloat16)

    def pad_b(b):
        c = _round_up(b.shape[1], LANE)
        return jnp.pad(b, ((0, 0), (0, c - b.shape[1])))    # biases stay f32

    return {
        "w1a": pad_w(w1a), "b1a": pad_b(b1a),
        "w1b": pad_w(raw["w1b"]), "b1b": pad_b(raw["b1b"]),
        "w2a": pad_w(w2a), "b2a": pad_b(b2a),
        "w2b": pad_w(raw["w2b"]), "b2b": pad_b(raw["b2b"]),
        "wl1": pad_w(raw["wl1"]), "bl1": pad_b(raw["bl1"]),
        "wl2": pad_w(raw["wl2"]), "bl2": pad_b(raw["bl2"]),
    }


def edge_index_to_adj_plus_i(edge_index, n_nodes):
    # A[dst, src] += 1 (PyG source_to_target, sum aggregation), plus I (eps=0)
    src, dst = edge_index[0], edge_index[1]
    adj = jnp.zeros((n_nodes, n_nodes), jnp.float32)
    adj = adj.at[dst, src].add(1.0)
    return adj + jnp.eye(n_nodes, dtype=jnp.float32)


# ------------------------------ pure-JAX reference ---------------------------
def gin_reference(adj_b, x_b, p, out_ch):
    """Mirrors the kernel math (folded BN, bf16 MXU operands, f32 accum)."""
    def one(adj, x):
        def mlp(h, wa, ba, wb, bb):
            t = jnp.dot(h.astype(jnp.bfloat16), wa,
                        preferred_element_type=jnp.float32) + ba
            t = jnp.maximum(t, 0.0)
            t = jnp.dot(t.astype(jnp.bfloat16), wb,
                        preferred_element_type=jnp.float32) + bb
            return jnp.maximum(t, 0.0)

        agg1 = jnp.dot(adj, x, preferred_element_type=jnp.float32)
        x1 = mlp(agg1, p["w1a"], p["b1a"], p["w1b"], p["b1b"])
        agg2 = jnp.dot(adj, x1.astype(jnp.bfloat16),
                       preferred_element_type=jnp.float32)
        x2 = mlp(agg2, p["w2a"], p["b2a"], p["w2b"], p["b2b"])
        h = jnp.maximum(jnp.dot(x2.astype(jnp.bfloat16), p["wl1"],
                                preferred_element_type=jnp.float32)
                        + p["bl1"], 0.0)
        logits = jnp.dot(h.astype(jnp.bfloat16), p["wl2"],
                         preferred_element_type=jnp.float32) + p["bl2"]
        return jax.nn.log_softmax(logits[:, :out_ch], axis=1)

    return jax.vmap(one)(adj_b, x_b)


# ---------------------------------- main --------------------------------------
if __name__ == "__main__":
    key = jax.random.PRNGKey(0)
    k_x, k_e, k_p = jax.random.split(key, 3)

    B = 4          # graphs per pallas_call (grid axis, "parallel")
    N_NODES = 32
    IN_CH = 16
    HIDDEN = 32
    OUT_CH = 8

    # node features: [B, N, IN_CH] -> lane-padded bf16
    x = jax.random.normal(k_x, (B, N_NODES, IN_CH), jnp.float32)
    x_pad = jnp.pad(x, ((0, 0), (0, 0), (0, _round_up(IN_CH, LANE) - IN_CH))
                    ).astype(jnp.bfloat16)

    # B deterministic small graphs: directed ring both ways + random edges
    idx = jnp.arange(N_NODES)
    adjs = []
    for kb in jax.random.split(k_e, B):
        ring_src = jnp.concatenate([idx, (idx + 1) % N_NODES])
        ring_dst = jnp.concatenate([(idx + 1) % N_NODES, idx])
        rnd = jax.random.randint(kb, (2, 16), 0, N_NODES)
        edge_index = jnp.stack([jnp.concatenate([ring_src, rnd[0]]),
                                jnp.concatenate([ring_dst, rnd[1]])])  # [2, E]
        adjs.append(edge_index_to_adj_plus_i(edge_index, N_NODES))
    adj_b = jnp.stack(adjs).astype(jnp.bfloat16)   # [B, N, N], small-int exact

    raw = init_params(k_p, IN_CH, HIDDEN, OUT_CH)
    params = prepare_params(raw)

    out = gin_forward(adj_b, x_pad, params, out_ch=OUT_CH)
    out = jax.block_until_ready(out)

    ref = gin_reference(adj_b, x_pad, params, OUT_CH)
    assert out.shape == (B, N_NODES, OUT_CH)
    assert jnp.allclose(out, ref, atol=1e-3, rtol=1e-3), \
        "mismatch vs JAX reference"

    print("KERNEL_OK")
</pallas_src>

<mosaic_0001>
module attributes {stable_mosaic.version = 11 : i64} {
  func.func @gin_kernel(%arg0: i32, %arg1: memref<1x32x32xbf16, #tpu.memory_space<vmem>>, %arg2: memref<1x32x128xbf16, #tpu.memory_space<vmem>>, %arg3: memref<128x128xbf16, #tpu.memory_space<vmem>>, %arg4: memref<1x128xf32, #tpu.memory_space<vmem>>, %arg5: memref<128x128xbf16, #tpu.memory_space<vmem>>, %arg6: memref<1x128xf32, #tpu.memory_space<vmem>>, %arg7: memref<128x128xbf16, #tpu.memory_space<vmem>>, %arg8: memref<1x128xf32, #tpu.memory_space<vmem>>, %arg9: memref<128x128xbf16, #tpu.memory_space<vmem>>, %arg10: memref<1x128xf32, #tpu.memory_space<vmem>>, %arg11: memref<128x128xbf16, #tpu.memory_space<vmem>>, %arg12: memref<1x128xf32, #tpu.memory_space<vmem>>, %arg13: memref<128x128xbf16, #tpu.memory_space<vmem>>, %arg14: memref<1x128xf32, #tpu.memory_space<vmem>>, %arg15: memref<1x32x128xf32, #tpu.memory_space<vmem>>) attributes {dimension_semantics = [#tpu.dimension_semantics<parallel>], iteration_bounds = array<i64: 4>, scalar_prefetch = 0 : i64, scratch_operands = 0 : i64, tpu.core_type = #tpu.core_type<tc>, window_params = [{transform_indices = @transform_0, window_bounds = array<i64: 1, 32, 32>}, {transform_indices = @transform_1, window_bounds = array<i64: 1, 32, 128>}, {pipeline_mode = #tpu.pipeline_mode<synchronous>, transform_indices = @transform_2, window_bounds = array<i64: 128, 128>}, {pipeline_mode = #tpu.pipeline_mode<synchronous>, transform_indices = @transform_3, window_bounds = array<i64: 1, 128>}, {pipeline_mode = #tpu.pipeline_mode<synchronous>, transform_indices = @transform_4, window_bounds = array<i64: 128, 128>}, {pipeline_mode = #tpu.pipeline_mode<synchronous>, transform_indices = @transform_5, window_bounds = array<i64: 1, 128>}, {pipeline_mode = #tpu.pipeline_mode<synchronous>, transform_indices = @transform_6, window_bounds = array<i64: 128, 128>}, {pipeline_mode = #tpu.pipeline_mode<synchronous>, transform_indices = @transform_7, window_bounds = array<i64: 1, 128>}, {pipeline_mode = #tpu.pipeline_mode<synchronous>, transform_indices = @transform_8, window_bounds = array<i64: 128, 128>}, {pipeline_mode = #tpu.pipeline_mode<synchronous>, transform_indices = @transform_9, window_bounds = array<i64: 1, 128>}, {pipeline_mode = #tpu.pipeline_mode<synchronous>, transform_indices = @transform_10, window_bounds = array<i64: 128, 128>}, {pipeline_mode = #tpu.pipeline_mode<synchronous>, transform_indices = @transform_11, window_bounds = array<i64: 1, 128>}, {pipeline_mode = #tpu.pipeline_mode<synchronous>, transform_indices = @transform_12, window_bounds = array<i64: 128, 128>}, {pipeline_mode = #tpu.pipeline_mode<synchronous>, transform_indices = @transform_13, window_bounds = array<i64: 1, 128>}, {transform_indices = @transform_14, window_bounds = array<i64: 1, 32, 128>}]} {
    %c0 = arith.constant 0 : index
    %c0_0 = arith.constant 0 : index
    %c0_1 = arith.constant 0 : index
    %0 = vector.load %arg1[%c0, %c0_0, %c0_1] : memref<1x32x32xbf16, #tpu.memory_space<vmem>>, vector<1x32x32xbf16>
    %1 = vector.shape_cast %0 : vector<1x32x32xbf16> to vector<32x32xbf16>
    %c0_2 = arith.constant 0 : index
    %c0_3 = arith.constant 0 : index
    %c0_4 = arith.constant 0 : index
    %2 = vector.load %arg2[%c0_2, %c0_3, %c0_4] : memref<1x32x128xbf16, #tpu.memory_space<vmem>>, vector<1x32x128xbf16>
    %3 = vector.shape_cast %2 : vector<1x32x128xbf16> to vector<32x128xbf16>
    %cst = arith.constant dense<0.000000e+00> : vector<32x128xf32>
    %4 = tpu.matmul %1, %3, %cst {dimension_numbers = #tpu.dot_dimension_numbers<[1], [0], [0], [1], [0, 0, 1, 1], [], []>} : vector<32x32xbf16>, vector<32x128xbf16>, vector<32x128xf32> -> vector<32x128xf32>
    %5 = arith.truncf %4 : vector<32x128xf32> to vector<32x128xbf16>
    %c0_5 = arith.constant 0 : index
    %c0_6 = arith.constant 0 : index
    %6 = vector.load %arg3[%c0_5, %c0_6] : memref<128x128xbf16, #tpu.memory_space<vmem>>, vector<128x128xbf16>
    %cst_7 = arith.constant dense<0.000000e+00> : vector<32x128xf32>
    %7 = tpu.matmul %5, %6, %cst_7 {dimension_numbers = #tpu.dot_dimension_numbers<[1], [0], [0], [1], [0, 0, 1, 1], [], []>} : vector<32x128xbf16>, vector<128x128xbf16>, vector<32x128xf32> -> vector<32x128xf32>
    %c0_8 = arith.constant 0 : index
    %c0_9 = arith.constant 0 : index
    %8 = vector.load %arg4[%c0_8, %c0_9] : memref<1x128xf32, #tpu.memory_space<vmem>>, vector<1x128xf32>
    %9 = vector.broadcast %8 : vector<1x128xf32> to vector<32x128xf32>
    %10 = arith.addf %7, %9 : vector<32x128xf32>
    %cst_10 = arith.constant 0.000000e+00 : f32
    %11 = vector.broadcast %cst_10 : f32 to vector<32x128xf32>
    %12 = arith.maximumf %10, %11 : vector<32x128xf32>
    %13 = arith.truncf %12 : vector<32x128xf32> to vector<32x128xbf16>
    %c0_11 = arith.constant 0 : index
    %c0_12 = arith.constant 0 : index
    %14 = vector.load %arg5[%c0_11, %c0_12] : memref<128x128xbf16, #tpu.memory_space<vmem>>, vector<128x128xbf16>
    %cst_13 = arith.constant dense<0.000000e+00> : vector<32x128xf32>
    %15 = tpu.matmul %13, %14, %cst_13 {dimension_numbers = #tpu.dot_dimension_numbers<[1], [0], [0], [1], [0, 0, 1, 1], [], []>} : vector<32x128xbf16>, vector<128x128xbf16>, vector<32x128xf32> -> vector<32x128xf32>
    %c0_14 = arith.constant 0 : index
    %c0_15 = arith.constant 0 : index
    %16 = vector.load %arg6[%c0_14, %c0_15] : memref<1x128xf32, #tpu.memory_space<vmem>>, vector<1x128xf32>
    %17 = vector.broadcast %16 : vector<1x128xf32> to vector<32x128xf32>
    %18 = arith.addf %15, %17 : vector<32x128xf32>
    %cst_16 = arith.constant 0.000000e+00 : f32
    %19 = vector.broadcast %cst_16 : f32 to vector<32x128xf32>
    %20 = arith.maximumf %18, %19 : vector<32x128xf32>
    %21 = arith.truncf %20 : vector<32x128xf32> to vector<32x128xbf16>
    %cst_17 = arith.constant dense<0.000000e+00> : vector<32x128xf32>
    %22 = tpu.matmul %1, %21, %cst_17 {dimension_numbers = #tpu.dot_dimension_numbers<[1], [0], [0], [1], [0, 0, 1, 1], [], []>} : vector<32x32xbf16>, vector<32x128xbf16>, vector<32x128xf32> -> vector<32x128xf32>
    %23 = arith.truncf %22 : vector<32x128xf32> to vector<32x128xbf16>
    %c0_18 = arith.constant 0 : index
    %c0_19 = arith.constant 0 : index
    %24 = vector.load %arg7[%c0_18, %c0_19] : memref<128x128xbf16, #tpu.memory_space<vmem>>, vector<128x128xbf16>
    %cst_20 = arith.constant dense<0.000000e+00> : vector<32x128xf32>
    %25 = tpu.matmul %23, %24, %cst_20 {dimension_numbers = #tpu.dot_dimension_numbers<[1], [0], [0], [1], [0, 0, 1, 1], [], []>} : vector<32x128xbf16>, vector<128x128xbf16>, vector<32x128xf32> -> vector<32x128xf32>
    %c0_21 = arith.constant 0 : index
    %c0_22 = arith.constant 0 : index
    %26 = vector.load %arg8[%c0_21, %c0_22] : memref<1x128xf32, #tpu.memory_space<vmem>>, vector<1x128xf32>
    %27 = vector.broadcast %26 : vector<1x128xf32> to vector<32x128xf32>
    %28 = arith.addf %25, %27 : vector<32x128xf32>
    %cst_23 = arith.constant 0.000000e+00 : f32
    %29 = vector.broadcast %cst_23 : f32 to vector<32x128xf32>
    %30 = arith.maximumf %28, %29 : vector<32x128xf32>
    %31 = arith.truncf %30 : vector<32x128xf32> to vector<32x128xbf16>
    %c0_24 = arith.constant 0 : index
    %c0_25 = arith.constant 0 : index
    %32 = vector.load %arg9[%c0_24, %c0_25] : memref<128x128xbf16, #tpu.memory_space<vmem>>, vector<128x128xbf16>
    %cst_26 = arith.constant dense<0.000000e+00> : vector<32x128xf32>
    %33 = tpu.matmul %31, %32, %cst_26 {dimension_numbers = #tpu.dot_dimension_numbers<[1], [0], [0], [1], [0, 0, 1, 1], [], []>} : vector<32x128xbf16>, vector<128x128xbf16>, vector<32x128xf32> -> vector<32x128xf32>
    %c0_27 = arith.constant 0 : index
    %c0_28 = arith.constant 0 : index
    %34 = vector.load %arg10[%c0_27, %c0_28] : memref<1x128xf32, #tpu.memory_space<vmem>>, vector<1x128xf32>
    %35 = vector.broadcast %34 : vector<1x128xf32> to vector<32x128xf32>
    %36 = arith.addf %33, %35 : vector<32x128xf32>
    %cst_29 = arith.constant 0.000000e+00 : f32
    %37 = vector.broadcast %cst_29 : f32 to vector<32x128xf32>
    %38 = arith.maximumf %36, %37 : vector<32x128xf32>
    %39 = arith.truncf %38 : vector<32x128xf32> to vector<32x128xbf16>
    %c0_30 = arith.constant 0 : index
    %c0_31 = arith.constant 0 : index
    %40 = vector.load %arg11[%c0_30, %c0_31] : memref<128x128xbf16, #tpu.memory_space<vmem>>, vector<128x128xbf16>
    %cst_32 = arith.constant dense<0.000000e+00> : vector<32x128xf32>
    %41 = tpu.matmul %39, %40, %cst_32 {dimension_numbers = #tpu.dot_dimension_numbers<[1], [0], [0], [1], [0, 0, 1, 1], [], []>} : vector<32x128xbf16>, vector<128x128xbf16>, vector<32x128xf32> -> vector<32x128xf32>
    %c0_33 = arith.constant 0 : index
    %c0_34 = arith.constant 0 : index
    %42 = vector.load %arg12[%c0_33, %c0_34] : memref<1x128xf32, #tpu.memory_space<vmem>>, vector<1x128xf32>
    %43 = vector.broadcast %42 : vector<1x128xf32> to vector<32x128xf32>
    %44 = arith.addf %41, %43 : vector<32x128xf32>
    %cst_35 = arith.constant 0.000000e+00 : f32
    %45 = vector.broadcast %cst_35 : f32 to vector<32x128xf32>
    %46 = arith.maximumf %44, %45 : vector<32x128xf32>
    %47 = arith.truncf %46 : vector<32x128xf32> to vector<32x128xbf16>
    %c0_36 = arith.constant 0 : index
    %c0_37 = arith.constant 0 : index
    %48 = vector.load %arg13[%c0_36, %c0_37] : memref<128x128xbf16, #tpu.memory_space<vmem>>, vector<128x128xbf16>
    %cst_38 = arith.constant dense<0.000000e+00> : vector<32x128xf32>
    %49 = tpu.matmul %47, %48, %cst_38 {dimension_numbers = #tpu.dot_dimension_numbers<[1], [0], [0], [1], [0, 0, 1, 1], [], []>} : vector<32x128xbf16>, vector<128x128xbf16>, vector<32x128xf32> -> vector<32x128xf32>
    %c0_39 = arith.constant 0 : index
    %c0_40 = arith.constant 0 : index
    %50 = vector.load %arg14[%c0_39, %c0_40] : memref<1x128xf32, #tpu.memory_space<vmem>>, vector<1x128xf32>
    %51 = vector.broadcast %50 : vector<1x128xf32> to vector<32x128xf32>
    %52 = arith.addf %49, %51 : vector<32x128xf32>
    %53 = tpu.iota {dimensions = array<i32: 1>} : vector<32x128xi32>
    %c8_i32 = arith.constant 8 : i32
    %54 = vector.broadcast %c8_i32 : i32 to vector<32x128xi32>
    %55 = arith.cmpi slt, %53, %54 : vector<32x128xi32>
    %cst_41 = arith.constant -1.000000e+30 : f32
    %56 = vector.broadcast %cst_41 : f32 to vector<32x128xf32>
    %57 = arith.select %55, %52, %56 : vector<32x128xi1>, vector<32x128xf32>
    %cst_42 = arith.constant dense<0xFF800000> : vector<32xf32>
    %58 = vector.multi_reduction <maximumf>, %57, %cst_42 [1] : vector<32x128xf32> to vector<32xf32>
    %59 = vector.shape_cast %58 : vector<32xf32> to vector<32x1xf32>
    %60 = vector.broadcast %59 : vector<32x1xf32> to vector<32x128xf32>
    %61 = arith.subf %57, %60 : vector<32x128xf32>
    %62 = math.exp %61 : vector<32x128xf32>
    %cst_43 = arith.constant 0.000000e+00 : f32
    %63 = vector.broadcast %cst_43 : f32 to vector<32x128xf32>
    %64 = arith.select %55, %62, %63 : vector<32x128xi1>, vector<32x128xf32>
    %cst_44 = arith.constant dense<0.000000e+00> : vector<32xf32>
    %65 = vector.multi_reduction <add>, %64, %cst_44 [1] : vector<32x128xf32> to vector<32xf32>
    %66 = vector.shape_cast %65 : vector<32xf32> to vector<32x1xf32>
    %67 = math.log %66 : vector<32x1xf32>
    %68 = vector.broadcast %67 : vector<32x1xf32> to vector<32x128xf32>
    %69 = arith.subf %61, %68 : vector<32x128xf32>
    %cst_45 = arith.constant 0.000000e+00 : f32
    %70 = vector.broadcast %cst_45 : f32 to vector<32x128xf32>
    %71 = arith.select %55, %69, %70 : vector<32x128xi1>, vector<32x128xf32>
    %c0_46 = arith.constant 0 : index
    %c0_47 = arith.constant 0 : index
    %c0_48 = arith.constant 0 : index
    %72 = vector.load %arg15[%c0_46, %c0_47, %c0_48] : memref<1x32x128xf32, #tpu.memory_space<vmem>>, vector<1x32x128xf32>
    %73 = vector.shape_cast %72 : vector<1x32x128xf32> to vector<32x128xf32>
    %74 = vector.shape_cast %71 : vector<32x128xf32> to vector<1x32x128xf32>
    tpu.vector_store %arg15[%c0_46, %c0_47, %c0_48], %74 {strides = array<i32>} : memref<1x32x128xf32, #tpu.memory_space<vmem>>, vector<1x32x128xf32>,
    return
  }
  func.func @transform_0(%arg0: i32) -> (i32, i32, i32) {
    %c0_i32 = arith.constant 0 : i32
    %c0_i32_0 = arith.constant 0 : i32
    %c0_i32_1 = arith.constant 0 : i32
    return %arg0, %c0_i32, %c0_i32_0 : i32, i32, i32
  }
  func.func @transform_1(%arg0: i32) -> (i32, i32, i32) {
    %c0_i32 = arith.constant 0 : i32
    %c0_i32_0 = arith.constant 0 : i32
    %c0_i32_1 = arith.constant 0 : i32
    return %arg0, %c0_i32, %c0_i32_0 : i32, i32, i32
  }
  func.func @transform_2(%arg0: i32) -> (i32, i32) {
    %c0_i32 = arith.constant 0 : i32
    %c0_i32_0 = arith.constant 0 : i32
    %c0_i32_1 = arith.constant 0 : i32
    return %c0_i32, %c0_i32_0 : i32, i32
  }
  func.func @transform_3(%arg0: i32) -> (i32, i32) {
    %c0_i32 = arith.constant 0 : i32
    %c0_i32_0 = arith.constant 0 : i32
    %c0_i32_1 = arith.constant 0 : i32
    return %c0_i32, %c0_i32_0 : i32, i32
  }
  func.func @transform_4(%arg0: i32) -> (i32, i32) {
    %c0_i32 = arith.constant 0 : i32
    %c0_i32_0 = arith.constant 0 : i32
    %c0_i32_1 = arith.constant 0 : i32
    return %c0_i32, %c0_i32_0 : i32, i32
  }
  func.func @transform_5(%arg0: i32) -> (i32, i32) {
    %c0_i32 = arith.constant 0 : i32
    %c0_i32_0 = arith.constant 0 : i32
    %c0_i32_1 = arith.constant 0 : i32
    return %c0_i32, %c0_i32_0 : i32, i32
  }
  func.func @transform_6(%arg0: i32) -> (i32, i32) {
    %c0_i32 = arith.constant 0 : i32
    %c0_i32_0 = arith.constant 0 : i32
    %c0_i32_1 = arith.constant 0 : i32
    return %c0_i32, %c0_i32_0 : i32, i32
  }
  func.func @transform_7(%arg0: i32) -> (i32, i32) {
    %c0_i32 = arith.constant 0 : i32
    %c0_i32_0 = arith.constant 0 : i32
    %c0_i32_1 = arith.constant 0 : i32
    return %c0_i32, %c0_i32_0 : i32, i32
  }
  func.func @transform_8(%arg0: i32) -> (i32, i32) {
    %c0_i32 = arith.constant 0 : i32
    %c0_i32_0 = arith.constant 0 : i32
    %c0_i32_1 = arith.constant 0 : i32
    return %c0_i32, %c0_i32_0 : i32, i32
  }
  func.func @transform_9(%arg0: i32) -> (i32, i32) {
    %c0_i32 = arith.constant 0 : i32
    %c0_i32_0 = arith.constant 0 : i32
    %c0_i32_1 = arith.constant 0 : i32
    return %c0_i32, %c0_i32_0 : i32, i32
  }
  func.func @transform_10(%arg0: i32) -> (i32, i32) {
    %c0_i32 = arith.constant 0 : i32
    %c0_i32_0 = arith.constant 0 : i32
    %c0_i32_1 = arith.constant 0 : i32
    return %c0_i32, %c0_i32_0 : i32, i32
  }
  func.func @transform_11(%arg0: i32) -> (i32, i32) {
    %c0_i32 = arith.constant 0 : i32
    %c0_i32_0 = arith.constant 0 : i32
    %c0_i32_1 = arith.constant 0 : i32
    return %c0_i32, %c0_i32_0 : i32, i32
  }
  func.func @transform_12(%arg0: i32) -> (i32, i32) {
    %c0_i32 = arith.constant 0 : i32
    %c0_i32_0 = arith.constant 0 : i32
    %c0_i32_1 = arith.constant 0 : i32
    return %c0_i32, %c0_i32_0 : i32, i32
  }
  func.func @transform_13(%arg0: i32) -> (i32, i32) {
    %c0_i32 = arith.constant 0 : i32
    %c0_i32_0 = arith.constant 0 : i32
    %c0_i32_1 = arith.constant 0 : i32
    return %c0_i32, %c0_i32_0 : i32, i32
  }
  func.func @transform_14(%arg0: i32) -> (i32, i32, i32) {
    %c0_i32 = arith.constant 0 : i32
    %c0_i32_0 = arith.constant 0 : i32
    %c0_i32_1 = arith.constant 0 : i32
    return %arg0, %c0_i32, %c0_i32_0 : i32, i32, i32
  }
}

</mosaic_0001>

<llo_original>
// kernel: tpu_custom_call.1
$region0: #{tpu_custom_call.1}
  #allocation0 [shape = 'u32[]', space=smem, size = 0x4, offset = 0x4, fixed_abs, tag = 'smem constant byte address 0x4 - core index']
  #allocation1 [shape = 'u32[72,128]{1,0:T(1,128)}', space=vmem, size = 0x9000, scoped, tag = 'internal scratch']
  %s0 = inlined_call_operand.hbm [shape: bf16[4,32,32], index: 0, kind: input, shape index: {}]
  %s1 = inlined_call_operand.hbm [shape: bf16[4,32,128], index: 1, kind: input, shape index: {}]
  %s2 = inlined_call_operand.hbm [shape: bf16[128,128], index: 2, kind: input, shape index: {}]
  %s3 = inlined_call_operand.vmem [shape: f32[1,128], index: 3, kind: input, shape index: {}]
  %s4 = inlined_call_operand.hbm [shape: bf16[128,128], index: 4, kind: input, shape index: {}]
  %s5 = inlined_call_operand.vmem [shape: f32[1,128], index: 5, kind: input, shape index: {}]
  %s6 = inlined_call_operand.hbm [shape: bf16[128,128], index: 6, kind: input, shape index: {}]
  %s7 = inlined_call_operand.vmem [shape: f32[1,128], index: 7, kind: input, shape index: {}]
  %s8 = inlined_call_operand.hbm [shape: bf16[128,128], index: 8, kind: input, shape index: {}]
  %s9 = inlined_call_operand.vmem [shape: f32[1,128], index: 9, kind: input, shape index: {}]
  %s10 = inlined_call_operand.hbm [shape: bf16[128,128], index: 10, kind: input, shape index: {}]
  %s11 = inlined_call_operand.vmem [shape: f32[1,128], index: 11, kind: input, shape index: {}]
  %s12 = inlined_call_operand.hbm [shape: bf16[128,128], index: 12, kind: input, shape index: {}]
  %s13 = inlined_call_operand.vmem [shape: f32[1,128], index: 13, kind: input, shape index: {}]
  %s14 = inlined_call_operand.hbm [shape: f32[4,32,128], index: 14, kind: output, shape index: {}]
  %s15 = sld [smem:[#allocation0]]
  $region121: #{tpu_custom_call.1} parent=0
    _
  %s17 = ssub.s32 1, %s15
  %s18 = scalar_select 0, %s17, %s15
  $region1: #{tpu_custom_call.1} parent=0
    #allocation2 [shape = 'u8[16384]{0}', space=vmem, size = 0x4000, scoped, tag = 'input window, operand 0']
    #allocation3 [shape = 's32[2]{0}', space=sflag, size = 0x8, scoped, tag = 'scoped memory for tpu_custom_call.1']
    #allocation4 [shape = 's32[2]{0}', space=sflag, size = 0x8, scoped, tag = 'scoped memory for tpu_custom_call.1']
    #allocation5 [shape = 'u8[16384]{0}', space=vmem, size = 0x4000, scoped, tag = 'input window, operand 1']
    #allocation6 [shape = 's32[2]{0}', space=sflag, size = 0x8, scoped, tag = 'scoped memory for tpu_custom_call.1']
    #allocation7 [shape = 'u8[32768]{0}', space=vmem, size = 0x8000, scoped, tag = 'input window, operand 2, single buffered']
    #allocation8 [shape = 'u8[32768]{0}', space=vmem, size = 0x8000, scoped, tag = 'input window, operand 4, single buffered']
    #allocation9 [shape = 's32[1]{0}', space=sflag, size = 0x4, scoped, tag = 'scoped memory for tpu_custom_call.1']
    #allocation10 [shape = 'u8[32768]{0}', space=vmem, size = 0x8000, scoped, tag = 'input window, operand 6, single buffered']
    #allocation11 [shape = 'u8[32768]{0}', space=vmem, size = 0x8000, scoped, tag = 'input window, operand 8, single buffered']
    #allocation12 [shape = 's32[1]{0}', space=sflag, size = 0x4, scoped, tag = 'scoped memory for tpu_custom_call.1']
    #allocation13 [shape = 'u8[32768]{0}', space=vmem, size = 0x8000, scoped, tag = 'input window, operand 10, single buffered']
    #allocation14 [shape = 'u8[32768]{0}', space=vmem, size = 0x8000, scoped, tag = 'input window, operand 12, single buffered']
    #allocation15 [shape = 's32[1]{0}', space=sflag, size = 0x4, scoped, tag = 'scoped memory for tpu_custom_call.1']
    #allocation16 [shape = 'u8[32768]{0}', space=vmem, size = 0x8000, scoped, tag = 'output window, operand 0']
    %19 = vsyncpa [#allocation3], 0
    %s20 = scalar_lea.sflag [#allocation3], 1
    %21 = vsyncpa %s20, 0
    %22 = vsyncpa [#allocation6], 0
    %s23 = scalar_lea.sflag [#allocation6], 1
    %24 = vsyncpa %s23, 0
    %25 = vsyncpa [#allocation9], 0
    %26 = vsyncpa [#allocation12], 0
    %27 = vsyncpa [#allocation15], 0
    %28 = vsyncpa [#allocation4], 0
    %s29 = scalar_lea.sflag [#allocation4], 1
    %30 = vsyncpa %s29, 0
    loop: start=0, step=1, limit=6
    $region2: #{tpu_custom_call.1} parent=1 // loop_pre_header
      _
    $region3: #{tpu_custom_call.1} parent=1 // loop_header
      %s32 = sphi 0, %s36
      %p33 = scmp.ge.s32.totalorder %s32, 6
      %s42 = sphi 0, %s44
      %s45 = sphi 0, %s42
      %s46 = sphi 0, %s45
      %s62 = sphi 0, %s46
      %s68 = sphi 0, %s70
      %s71 = sphi 0, %s68
      %s72 = sphi 0, %s71
      %s88 = sphi 0, %s72
      %s92 = sphi 0, %s92
      %s94 = sphi 0, %s92
      %s95 = sphi 0, %s94
      %s109 = sphi 0, %s95
      %s113 = sphi 0, %s113
      %s115 = sphi 0, %s113
      %s116 = sphi 0, %s115
      %s130 = sphi 0, %s116
      %s134 = sphi 0, %s134
      %s136 = sphi 0, %s134
      %s137 = sphi 0, %s136
      %s151 = sphi 0, %s137
      %s155 = sphi 0, %s155
      %s157 = sphi 0, %s155
      %s158 = sphi 0, %s157
      %s172 = sphi 0, %s158
      %s176 = sphi 0, %s176
      %s178 = sphi 0, %s176
      %s179 = sphi 0, %s178
      %s193 = sphi 0, %s179
      %s197 = sphi 0, %s197
      %s199 = sphi 0, %s197
      %s200 = sphi 0, %s199
      %s214 = sphi 0, %s200
      %s218 = sphi 0, %s218
      %s220 = sphi 0, %s218
      %s221 = sphi 0, %s220
      %s235 = sphi 0, %s221
      %s239 = sphi 0, %s239
      %s241 = sphi 0, %s239
      %s242 = sphi 0, %s241
      %s256 = sphi 0, %s242
      %s260 = sphi 0, %s260
      %s262 = sphi 0, %s260
      %s263 = sphi 0, %s262
      %s277 = sphi 0, %s263
      %s281 = sphi 0, %s281
      %s283 = sphi 0, %s281
      %s284 = sphi 0, %s283
      %s298 = sphi 0, %s284
      %s302 = sphi 0, %s302
      %s304 = sphi 0, %s302
      %s305 = sphi 0, %s304
      %s319 = sphi 0, %s305
      %s323 = sphi 0, %s323
      %s325 = sphi 0, %s323
      %s326 = sphi 0, %s325
      %s340 = sphi 0, %s326
      %s346 = sphi 0, %s348
      %s349 = sphi 0, %s346
      %s350 = sphi 0, %s349
      %s366 = sphi 0, %s350
    $region4: #{tpu_custom_call.1} parent=1 // loop_header_branch
      %35 = sbr.rel (%p33) target = $region8
    $region5: #{tpu_custom_call.1} parent=1 // loop_body
      %s37 = ssub.s32 %s32, 1
      %s38 = ssub.s32 %s32, 2
      %s39 = sadd.s32 %s32, 1
      %s40 = ssub.s32 %s32, %s39
      %p41 = scmp.eq.s32.totalorder %s40, 0
      %s43 = sadd.s32 %s42, 1
      %s44 = scalar_select %p41, %s42, %s43
      %p47 = pneg %p41
      %p48 = scmp.eq.s32.totalorder %s32, 3
      %p49 = por %p47, %p48
      %p50 = scmp.ne.s32.totalorder %s42, %s45
      %p51 = scmp.eq.s32.totalorder %s32, 0
      %p52 = por %p50, %p51
      %p53 = scmp.ne.s32.totalorder %s42, %s45
      %p54 = scmp.eq.s32.totalorder %s37, 3
      %p55 = por %p53, %p54
      %p56 = scmp.ne.s32.totalorder %s45, %s46
      %p57 = scmp.eq.s32.totalorder %s37, 0
      %p58 = por %p56, %p57
      %p59 = scmp.ne.s32.totalorder %s45, %s46
      %p60 = scmp.eq.s32.totalorder %s38, 3
      %p61 = por %p59, %p60
      %p63 = scmp.ne.s32.totalorder %s46, %s62
      %p64 = scmp.eq.s32.totalorder %s38, 0
      %p65 = por %p63, %p64
      %s66 = ssub.s32 %s32, %s39
      %p67 = scmp.eq.s32.totalorder %s66, 0
      %s69 = sadd.s32 %s68, 1
      %s70 = scalar_select %p67, %s68, %s69
      %p73 = pneg %p67
      %p74 = scmp.eq.s32.totalorder %s32, 3
      %p75 = por %p73, %p74
      %p76 = scmp.ne.s32.totalorder %s68, %s71
      %p77 = scmp.eq.s32.totalorder %s32, 0
      %p78 = por %p76, %p77
      %p79 = scmp.ne.s32.totalorder %s68, %s71
      %p80 = scmp.eq.s32.totalorder %s37, 3
      %p81 = por %p79, %p80
      %p82 = scmp.ne.s32.totalorder %s71, %s72
      %p83 = scmp.eq.s32.totalorder %s37, 0
      %p84 = por %p82, %p83
      %p85 = scmp.ne.s32.totalorder %s71, %s72
      %p86 = scmp.eq.s32.totalorder %s38, 3
      %p87 = por %p85, %p86
      %p89 = scmp.ne.s32.totalorder %s72, %s88
      %p90 = scmp.eq.s32.totalorder %s38, 0
      %p91 = por %p89, %p90
      %s93 = sadd.s32 %s92, 1
      %p96 = scmp.eq.s32.totalorder %s32, 3
      %p97 = scmp.ne.s32.totalorder %s92, %s94
      %p98 = scmp.eq.s32.totalorder %s32, 0
      %p99 = por %p97, %p98
      %p100 = scmp.ne.s32.totalorder %s92, %s94
      %p101 = scmp.eq.s32.totalorder %s37, 3
      %p102 = por %p100, %p101
      %p103 = scmp.ne.s32.totalorder %s94, %s95
      %p104 = scmp.eq.s32.totalorder %s37, 0
      %p105 = por %p103, %p104
      %p106 = scmp.ne.s32.totalorder %s94, %s95
      %p107 = scmp.eq.s32.totalorder %s38, 3
      %p108 = por %p106, %p107
      %p110 = scmp.ne.s32.totalorder %s95, %s109
      %p111 = scmp.eq.s32.totalorder %s38, 0
      %p112 = por %p110, %p111
      %s114 = sadd.s32 %s113, 1
      %p117 = scmp.eq.s32.totalorder %s32, 3
      %p118 = scmp.ne.s32.totalorder %s113, %s115
      %p119 = scmp.eq.s32.totalorder %s32, 0
      %p120 = por %p118, %p119
      %p121 = scmp.ne.s32.totalorder %s113, %s115
      %p122 = scmp.eq.s32.totalorder %s37, 3
      %p123 = por %p121, %p122
      %p124 = scmp.ne.s32.totalorder %s115, %s116
      %p125 = scmp.eq.s32.totalorder %s37, 0
      %p126 = por %p124, %p125
      %p127 = scmp.ne.s32.totalorder %s115, %s116
      %p128 = scmp.eq.s32.totalorder %s38, 3
      %p129 = por %p127, %p128
      %p131 = scmp.ne.s32.totalorder %s116, %s130
      %p132 = scmp.eq.s32.totalorder %s38, 0
      %p133 = por %p131, %p132
      %s135 = sadd.s32 %s134, 1
      %p138 = scmp.eq.s32.totalorder %s32, 3
      %p139 = scmp.ne.s32.totalorder %s134, %s136
      %p140 = scmp.eq.s32.totalorder %s32, 0
      %p141 = por %p139, %p140
      %p142 = scmp.ne.s32.totalorder %s134, %s136
      %p143 = scmp.eq.s32.totalorder %s37, 3
      %p144 = por %p142, %p143
      %p145 = scmp.ne.s32.totalorder %s136, %s137
      %p146 = scmp.eq.s32.totalorder %s37, 0
      %p147 = por %p145, %p146
      %p148 = scmp.ne.s32.totalorder %s136, %s137
      %p149 = scmp.eq.s32.totalorder %s38, 3
      %p150 = por %p148, %p149
      %p152 = scmp.ne.s32.totalorder %s137, %s151
      %p153 = scmp.eq.s32.totalorder %s38, 0
      %p154 = por %p152, %p153
      %s156 = sadd.s32 %s155, 1
      %p159 = scmp.eq.s32.totalorder %s32, 3
      %p160 = scmp.ne.s32.totalorder %s155, %s157
      %p161 = scmp.eq.s32.totalorder %s32, 0
      %p162 = por %p160, %p161
      %p163 = scmp.ne.s32.totalorder %s155, %s157
      %p164 = scmp.eq.s32.totalorder %s37, 3
      %p165 = por %p163, %p164
      %p166 = scmp.ne.s32.totalorder %s157, %s158
      %p167 = scmp.eq.s32.totalorder %s37, 0
      %p168 = por %p166, %p167
      %p169 = scmp.ne.s32.totalorder %s157, %s158
      %p170 = scmp.eq.s32.totalorder %s38, 3
      %p171 = por %p169, %p170
      %p173 = scmp.ne.s32.totalorder %s158, %s172
      %p174 = scmp.eq.s32.totalorder %s38, 0
      %p175 = por %p173, %p174
      %s177 = sadd.s32 %s176, 1
      %p180 = scmp.eq.s32.totalorder %s32, 3
      %p181 = scmp.ne.s32.totalorder %s176, %s178
      %p182 = scmp.eq.s32.totalorder %s32, 0
      %p183 = por %p181, %p182
      %p184 = scmp.ne.s32.totalorder %s176, %s178
      %p185 = scmp.eq.s32.totalorder %s37, 3
      %p186 = por %p184, %p185
      %p187 = scmp.ne.s32.totalorder %s178, %s179
      %p188 = scmp.eq.s32.totalorder %s37, 0
      %p189 = por %p187, %p188
      %p190 = scmp.ne.s32.totalorder %s178, %s179
      %p191 = scmp.eq.s32.totalorder %s38, 3
      %p192 = por %p190, %p191
      %p194 = scmp.ne.s32.totalorder %s179, %s193
      %p195 = scmp.eq.s32.totalorder %s38, 0
      %p196 = por %p194, %p195
      %s198 = sadd.s32 %s197, 1
      %p201 = scmp.eq.s32.totalorder %s32, 3
      %p202 = scmp.ne.s32.totalorder %s197, %s199
      %p203 = scmp.eq.s32.totalorder %s32, 0
      %p204 = por %p202, %p203
      %p205 = scmp.ne.s32.totalorder %s197, %s199
      %p206 = scmp.eq.s32.totalorder %s37, 3
      %p207 = por %p205, %p206
      %p208 = scmp.ne.s32.totalorder %s199, %s200
      %p209 = scmp.eq.s32.totalorder %s37, 0
      %p210 = por %p208, %p209
      %p211 = scmp.ne.s32.totalorder %s199, %s200
      %p212 = scmp.eq.s32.totalorder %s38, 3
      %p213 = por %p211, %p212
      %p215 = scmp.ne.s32.totalorder %s200, %s214
      %p216 = scmp.eq.s32.totalorder %s38, 0
      %p217 = por %p215, %p216
      %s219 = sadd.s32 %s218, 1
      %p222 = scmp.eq.s32.totalorder %s32, 3
      %p223 = scmp.ne.s32.totalorder %s218, %s220
      %p224 = scmp.eq.s32.totalorder %s32, 0
      %p225 = por %p223, %p224
      %p226 = scmp.ne.s32.totalorder %s218, %s220
      %p227 = scmp.eq.s32.totalorder %s37, 3
      %p228 = por %p226, %p227
      %p229 = scmp.ne.s32.totalorder %s220, %s221
      %p230 = scmp.eq.s32.totalorder %s37, 0
      %p231 = por %p229, %p230
      %p232 = scmp.ne.s32.totalorder %s220, %s221
      %p233 = scmp.eq.s32.totalorder %s38, 3
      %p234 = por %p232, %p233
      %p236 = scmp.ne.s32.totalorder %s221, %s235
      %p237 = scmp.eq.s32.totalorder %s38, 0
      %p238 = por %p236, %p237
      %s240 = sadd.s32 %s239, 1
      %p243 = scmp.eq.s32.totalorder %s32, 3
      %p244 = scmp.ne.s32.totalorder %s239, %s241
      %p245 = scmp.eq.s32.totalorder %s32, 0
      %p246 = por %p244, %p245
      %p247 = scmp.ne.s32.totalorder %s239, %s241
      %p248 = scmp.eq.s32.totalorder %s37, 3
      %p249 = por %p247, %p248
      %p250 = scmp.ne.s32.totalorder %s241, %s242
      %p251 = scmp.eq.s32.totalorder %s37, 0
      %p252 = por %p250, %p251
      %p253 = scmp.ne.s32.totalorder %s241, %s242
      %p254 = scmp.eq.s32.totalorder %s38, 3
      %p255 = por %p253, %p254
      %p257 = scmp.ne.s32.totalorder %s242, %s256
      %p258 = scmp.eq.s32.totalorder %s38, 0
      %p259 = por %p257, %p258
      %s261 = sadd.s32 %s260, 1
      %p264 = scmp.eq.s32.totalorder %s32, 3
      %p265 = scmp.ne.s32.totalorder %s260, %s262
      %p266 = scmp.eq.s32.totalorder %s32, 0
      %p267 = por %p265, %p266
      %p268 = scmp.ne.s32.totalorder %s260, %s262
      %p269 = scmp.eq.s32.totalorder %s37, 3
      %p270 = por %p268, %p269
      %p271 = scmp.ne.s32.totalorder %s262, %s263
      %p272 = scmp.eq.s32.totalorder %s37, 0
      %p273 = por %p271, %p272
      %p274 = scmp.ne.s32.totalorder %s262, %s263
      %p275 = scmp.eq.s32.totalorder %s38, 3
      %p276 = por %p274, %p275
      %p278 = scmp.ne.s32.totalorder %s263, %s277
      %p279 = scmp.eq.s32.totalorder %s38, 0
      %p280 = por %p278, %p279
      %s282 = sadd.s32 %s281, 1
      %p285 = scmp.eq.s32.totalorder %s32, 3
      %p286 = scmp.ne.s32.totalorder %s281, %s283
      %p287 = scmp.eq.s32.totalorder %s32, 0
      %p288 = por %p286, %p287
      %p289 = scmp.ne.s32.totalorder %s281, %s283
      %p290 = scmp.eq.s32.totalorder %s37, 3
      %p291 = por %p289, %p290
      %p292 = scmp.ne.s32.totalorder %s283, %s284
      %p293 = scmp.eq.s32.totalorder %s37, 0
      %p294 = por %p292, %p293
      %p295 = scmp.ne.s32.totalorder %s283, %s284
      %p296 = scmp.eq.s32.totalorder %s38, 3
      %p297 = por %p295, %p296
      %p299 = scmp.ne.s32.totalorder %s284, %s298
      %p300 = scmp.eq.s32.totalorder %s38, 0
      %p301 = por %p299, %p300
      %s303 = sadd.s32 %s302, 1
      %p306 = scmp.eq.s32.totalorder %s32, 3
      %p307 = scmp.ne.s32.totalorder %s302, %s304
      %p308 = scmp.eq.s32.totalorder %s32, 0
      %p309 = por %p307, %p308
      %p310 = scmp.ne.s32.totalorder %s302, %s304
      %p311 = scmp.eq.s32.totalorder %s37, 3
      %p312 = por %p310, %p311
      %p313 = scmp.ne.s32.totalorder %s304, %s305
      %p314 = scmp.eq.s32.totalorder %s37, 0
      %p315 = por %p313, %p314
      %p316 = scmp.ne.s32.totalorder %s304, %s305
      %p317 = scmp.eq.s32.totalorder %s38, 3
      %p318 = por %p316, %p317
      %p320 = scmp.ne.s32.totalorder %s305, %s319
      %p321 = scmp.eq.s32.totalorder %s38, 0
      %p322 = por %p320, %p321
      %s324 = sadd.s32 %s323, 1
      %p327 = scmp.eq.s32.totalorder %s32, 3
      %p328 = scmp.ne.s32.totalorder %s323, %s325
      %p329 = scmp.eq.s32.totalorder %s32, 0
      %p330 = por %p328, %p329
      %p331 = scmp.ne.s32.totalorder %s323, %s325
      %p332 = scmp.eq.s32.totalorder %s37, 3
      %p333 = por %p331, %p332
      %p334 = scmp.ne.s32.totalorder %s325, %s326
      %p335 = scmp.eq.s32.totalorder %s37, 0
      %p336 = por %p334, %p335
      %p337 = scmp.ne.s32.totalorder %s325, %s326
      %p338 = scmp.eq.s32.totalorder %s38, 3
      %p339 = por %p337, %p338
      %p341 = scmp.ne.s32.totalorder %s326, %s340
      %p342 = scmp.eq.s32.totalorder %s38, 0
      %p343 = por %p341, %p342
      %s344 = ssub.s32 %s32, %s39
      %p345 = scmp.eq.s32.totalorder %s344, 0
      %s347 = sadd.s32 %s346, 1
      %s348 = scalar_select %p345, %s346, %s347
      %p351 = pneg %p345
      %p352 = scmp.eq.s32.totalorder %s32, 3
      %p353 = por %p351, %p352
      %p354 = scmp.ne.s32.totalorder %s346, %s349
      %p355 = scmp.eq.s32.totalorder %s32, 0
      %p356 = por %p354, %p355
      %p357 = scmp.ne.s32.totalorder %s346, %s349
      %p358 = scmp.eq.s32.totalorder %s37, 3
      %p359 = por %p357, %p358
      %p360 = scmp.ne.s32.totalorder %s349, %s350
      %p361 = scmp.eq.s32.totalorder %s37, 0
      %p362 = por %p360, %p361
      %p363 = scmp.ne.s32.totalorder %s349, %s350
      %p364 = scmp.eq.s32.totalorder %s38, 3
      %p365 = por %p363, %p364
      %p367 = scmp.ne.s32.totalorder %s350, %s366
      %p368 = scmp.eq.s32.totalorder %s38, 0
      %p369 = por %p367, %p368
      %p370 = scmp.le.s32.totalorder 1, %s32
      %p371 = scmp.lt.s32.totalorder %s32, 5
      %p372 = pnand %p370, %p371
      %p373 = pneg %p372
      // Predicated region
      $region9: #{tpu_custom_call.1} parent=5 // pred_check
        _
      $region10: #{tpu_custom_call.1} parent=5 // pred_check_branch
        %375 = sbr.rel (%p372) target = $region12
      $region11: #{tpu_custom_call.1} parent=5 // pred_region
        %s376 = ssub.s32 %s32, 1
        // Predicated region
        $region13: #{tpu_custom_call.1} parent=11 // pred_check
          %p377 = pneg %p105
        $region14: #{tpu_custom_call.1} parent=11 // pred_check_branch
          %379 = sbr.rel (%p377) target = $region16
        $region15: #{tpu_custom_call.1} parent=11 // pred_region
          %381 = vsyncadd [#allocation6], 0
          %s382 = sshll.u32 %s2, 4
          %s383 = int_to_ptr.hbm [resolvable:$true] %s382
          %s384 = sshll.u32 [#allocation7], 4
          %s385 = int_to_ptr.vmem [resolvable:$true] %s384
          %390 = dma.hbm_to_vmem [thread:$0]  %s383, 1024, %s385, [#allocation6], 64, 64, 4
        $region16: #{tpu_custom_call.1} parent=11 // pred_fallthru
          _
        // Predicated region
        $region17: #{tpu_custom_call.1} parent=11 // pred_check
          %p391 = pneg %p126
        $region18: #{tpu_custom_call.1} parent=11 // pred_check_branch
          %393 = sbr.rel (%p391) target = $region20
        $region19: #{tpu_custom_call.1} parent=11 // pred_region
          _
        $region20: #{tpu_custom_call.1} parent=11 // pred_fallthru
          _
        // Predicated region
        $region21: #{tpu_custom_call.1} parent=11 // pred_check
          %p394 = pneg %p147
        $region22: #{tpu_custom_call.1} parent=11 // pred_check_branch
          %396 = sbr.rel (%p394) target = $region24
        $region23: #{tpu_custom_call.1} parent=11 // pred_region
          %398 = vsyncadd [#allocation9], 0
          %s399 = sshll.u32 %s4, 4
          %s400 = int_to_ptr.hbm [resolvable:$true] %s399
          %s401 = sshll.u32 [#allocation8], 4
          %s402 = int_to_ptr.vmem [resolvable:$true] %s401
          %407 = dma.hbm_to_vmem [thread:$0]  %s400, 1024, %s402, [#allocation9], 64, 64, 4
        $region24: #{tpu_custom_call.1} parent=11 // pred_fallthru
          _
        // Predicated region
        $region25: #{tpu_custom_call.1} parent=11 // pred_check
          %p408 = pneg %p168
        $region26: #{tpu_custom_call.1} parent=11 // pred_check_branch
          %410 = sbr.rel (%p408) target = $region28
        $region27: #{tpu_custom_call.1} parent=11 // pred_region
          _
        $region28: #{tpu_custom_call.1} parent=11 // pred_fallthru
          _
        // Predicated region
        $region29: #{tpu_custom_call.1} parent=11 // pred_check
          %p411 = pneg %p189
        $region30: #{tpu_custom_call.1} parent=11 // pred_check_branch
          %413 = sbr.rel (%p411) target = $region32
        $region31: #{tpu_custom_call.1} parent=11 // pred_region
          %415 = vsyncadd [#allocation9], 0
          %s416 = sshll.u32 %s6, 4
          %s417 = int_to_ptr.hbm [resolvable:$true] %s416
          %s418 = sshll.u32 [#allocation10], 4
          %s419 = int_to_ptr.vmem [resolvable:$true] %s418
          %424 = dma.hbm_to_vmem [thread:$0]  %s417, 1024, %s419, [#allocation9], 64, 64, 4
        $region32: #{tpu_custom_call.1} parent=11 // pred_fallthru
          _
        // Predicated region
        $region33: #{tpu_custom_call.1} parent=11 // pred_check
          %p425 = pneg %p210
        $region34: #{tpu_custom_call.1} parent=11 // pred_check_branch
          %427 = sbr.rel (%p425) target = $region36
        $region35: #{tpu_custom_call.1} parent=11 // pred_region
          _
        $region36: #{tpu_custom_call.1} parent=11 // pred_fallthru
          _
        // Predicated region
        $region37: #{tpu_custom_call.1} parent=11 // pred_check
          %p428 = pneg %p231
        $region38: #{tpu_custom_call.1} parent=11 // pred_check_branch
          %430 = sbr.rel (%p428) target = $region40
        $region39: #{tpu_custom_call.1} parent=11 // pred_region
          %432 = vsyncadd [#allocation12], 0
          %s433 = sshll.u32 %s8, 4
          %s434 = int_to_ptr.hbm [resolvable:$true] %s433
          %s435 = sshll.u32 [#allocation11], 4
          %s436 = int_to_ptr.vmem [resolvable:$true] %s435
          %441 = dma.hbm_to_vmem [thread:$0]  %s434, 1024, %s436, [#allocation12], 64, 64, 4
        $region40: #{tpu_custom_call.1} parent=11 // pred_fallthru
          _
        // Predicated region
        $region41: #{tpu_custom_call.1} parent=11 // pred_check
          %p442 = pneg %p252
        $region42: #{tpu_custom_call.1} parent=11 // pred_check_branch
          %444 = sbr.rel (%p442) target = $region44
        $region43: #{tpu_custom_call.1} parent=11 // pred_region
          _
        $region44: #{tpu_custom_call.1} parent=11 // pred_fallthru
          _
        // Predicated region
        $region45: #{tpu_custom_call.1} parent=11 // pred_check
          %p445 = pneg %p273
        $region46: #{tpu_custom_call.1} parent=11 // pred_check_branch
          %447 = sbr.rel (%p445) target = $region48
        $region47: #{tpu_custom_call.1} parent=11 // pred_region
          %449 = vsyncadd [#allocation12], 0
          %s450 = sshll.u32 %s10, 4
          %s451 = int_to_ptr.hbm [resolvable:$true] %s450
          %s452 = sshll.u32 [#allocation13], 4
          %s453 = int_to_ptr.vmem [resolvable:$true] %s452
          %458 = dma.hbm_to_vmem [thread:$0]  %s451, 1024, %s453, [#allocation12], 64, 64, 4
        $region48: #{tpu_custom_call.1} parent=11 // pred_fallthru
          _
        // Predicated region
        $region49: #{tpu_custom_call.1} parent=11 // pred_check
          %p459 = pneg %p294
        $region50: #{tpu_custom_call.1} parent=11 // pred_check_branch
          %461 = sbr.rel (%p459) target = $region52
        $region51: #{tpu_custom_call.1} parent=11 // pred_region
          _
        $region52: #{tpu_custom_call.1} parent=11 // pred_fallthru
          _
        // Predicated region
        $region53: #{tpu_custom_call.1} parent=11 // pred_check
          %p462 = pneg %p315
        $region54: #{tpu_custom_call.1} parent=11 // pred_check_branch
          %464 = sbr.rel (%p462) target = $region56
        $region55: #{tpu_custom_call.1} parent=11 // pred_region
          %466 = vsyncadd [#allocation15], 0
          %s467 = sshll.u32 %s12, 4
          %s468 = int_to_ptr.hbm [resolvable:$true] %s467
          %s469 = sshll.u32 [#allocation14], 4
          %s470 = int_to_ptr.vmem [resolvable:$true] %s469
          %475 = dma.hbm_to_vmem [thread:$0]  %s468, 1024, %s470, [#allocation15], 64, 64, 4
        $region56: #{tpu_custom_call.1} parent=11 // pred_fallthru
          _
        // Predicated region
        $region57: #{tpu_custom_call.1} parent=11 // pred_check
          %p476 = pneg %p336
        $region58: #{tpu_custom_call.1} parent=11 // pred_check_branch
          %478 = sbr.rel (%p476) target = $region60
        $region59: #{tpu_custom_call.1} parent=11 // pred_region
          _
        $region60: #{tpu_custom_call.1} parent=11 // pred_fallthru
          _
      $region12: #{tpu_custom_call.1} parent=5 // pred_fallthru
        _
      %p479 = scmp.lt.s32.totalorder %s32, 4
      // Predicated region
      $region61: #{tpu_custom_call.1} parent=5 // pred_check
        %p480 = pneg %p479
      $region62: #{tpu_custom_call.1} parent=5 // pred_check_branch
        %482 = sbr.rel (%p480) target = $region64
      $region63: #{tpu_custom_call.1} parent=5 // pred_region
        // Predicated region
        $region65: #{tpu_custom_call.1} parent=63 // pred_check
          %p483 = pneg %p52
        $region66: #{tpu_custom_call.1} parent=63 // pred_check_branch
          %485 = sbr.rel (%p483) target = $region68
        $region67: #{tpu_custom_call.1} parent=63 // pred_region
          %s486 = sand.u32 %s42, 1
          %s487 = scalar_lea.sflag [#allocation3], %s486
          %s488 = sand.u32 %s42, 1
          %s489 = smul.addr %s488, 16
          %s490 = scalar_lea.vmem [#allocation2], %s489
          %492 = vsyncadd %s487, 0
          %s493 = smul.addr %s32, 4
          %s494 = smul.addr %s493, 4
          %s495 = scalar_lea.hbm %s0, %s494
          %s496 = sshll.u32 %s495, 4
          %s497 = int_to_ptr.hbm [resolvable:$true] %s496
          %s498 = sshll.u32 %s490, 4
          %s499 = int_to_ptr.vmem [resolvable:$true] %s498
          %504 = dma.hbm_to_vmem [thread:$0]  %s497, 256, %s499, %s487, 64, 64, 4
        $region68: #{tpu_custom_call.1} parent=63 // pred_fallthru
          _
        // Predicated region
        $region69: #{tpu_custom_call.1} parent=63 // pred_check
          %p505 = pneg %p78
        $region70: #{tpu_custom_call.1} parent=63 // pred_check_branch
          %507 = sbr.rel (%p505) target = $region72
        $region71: #{tpu_custom_call.1} parent=63 // pred_region
          %s508 = sand.u32 %s32, 1
          %s509 = scalar_lea.sflag [#allocation6], %s508
          %s510 = sand.u32 %s68, 1
          %s511 = smul.addr %s510, 16
          %s512 = scalar_lea.vmem [#allocation5], %s511
          %514 = vsyncadd %s509, 0
          %s515 = smul.addr %s32, 4
          %s516 = smul.addr %s515, 4
          %s517 = scalar_lea.hbm %s1, %s516
          %s518 = sshll.u32 %s517, 4
          %s519 = int_to_ptr.hbm [resolvable:$true] %s518
          %s520 = sshll.u32 %s512, 4
          %s521 = int_to_ptr.vmem [resolvable:$true] %s520
          %526 = dma.hbm_to_vmem [thread:$0]  %s519, 256, %s521, %s509, 64, 64, 4
        $region72: #{tpu_custom_call.1} parent=63 // pred_fallthru
          _
      $region64: #{tpu_custom_call.1} parent=5 // pred_fallthru
        _
      %p527 = scmp.le.s32.totalorder 1, %s32
      %p528 = scmp.lt.s32.totalorder %s32, 5
      %p529 = pnand %p527, %p528
      %p530 = pneg %p529
      // Predicated region
      $region73: #{tpu_custom_call.1} parent=5 // pred_check
        _
      $region74: #{tpu_custom_call.1} parent=5 // pred_check_branch
        %532 = sbr.rel (%p529) target = $region76
      $region75: #{tpu_custom_call.1} parent=5 // pred_region
        %s533 = ssub.s32 %s32, 1
        %s534 = sand.u32 %s45, 1
        %s535 = scalar_lea.sflag [#allocation3], %s534
        %s536 = sand.u32 %s45, 1
        %s537 = smul.addr %s536, 16
        %s538 = scalar_lea.vmem [#allocation2], %s537
        // Predicated region
        $region77: #{tpu_custom_call.1} parent=75 // pred_check
          %p539 = pneg %p58
        $region78: #{tpu_custom_call.1} parent=75 // pred_check_branch
          %541 = sbr.rel (%p539) target = $region80
        $region79: #{tpu_custom_call.1} parent=75 // pred_region
          %543 = dma.done %s535, 256
        $region80: #{tpu_custom_call.1} parent=75 // pred_fallthru
          _
        %s544 = sand.u32 %s37, 1
        %s545 = scalar_lea.sflag [#allocation6], %s544
        %s546 = sand.u32 %s71, 1
        %s547 = smul.addr %s546, 16
        %s548 = scalar_lea.vmem [#allocation5], %s547
        // Predicated region
        $region81: #{tpu_custom_call.1} parent=75 // pred_check
          %p549 = pneg %p84
        $region82: #{tpu_custom_call.1} parent=75 // pred_check_branch
          %551 = sbr.rel (%p549) target = $region84
        $region83: #{tpu_custom_call.1} parent=75 // pred_region
          %553 = dma.done %s545, 256
        $region84: #{tpu_custom_call.1} parent=75 // pred_fallthru
          _
        // Predicated region
        $region85: #{tpu_custom_call.1} parent=75 // pred_check
          %p554 = pneg %p105
        $region86: #{tpu_custom_call.1} parent=75 // pred_check_branch
          %556 = sbr.rel (%p554) target = $region88
        $region87: #{tpu_custom_call.1} parent=75 // pred_region
          %558 = dma.done [#allocation6], 1024
        $region88: #{tpu_custom_call.1} parent=75 // pred_fallthru
          _
        // Predicated region
        $region89: #{tpu_custom_call.1} parent=75 // pred_check
          %p559 = pneg %p147
        $region90: #{tpu_custom_call.1} parent=75 // pred_check_branch
          %561 = sbr.rel (%p559) target = $region92
        $region91: #{tpu_custom_call.1} parent=75 // pred_region
          %563 = dma.done [#allocation9], 1024
        $region92: #{tpu_custom_call.1} parent=75 // pred_fallthru
          _
        // Predicated region
        $region93: #{tpu_custom_call.1} parent=75 // pred_check
          %p564 = pneg %p189
        $region94: #{tpu_custom_call.1} parent=75 // pred_check_branch
          %566 = sbr.rel (%p564) target = $region96
        $region95: #{tpu_custom_call.1} parent=75 // pred_region
          %568 = dma.done [#allocation9], 1024
        $region96: #{tpu_custom_call.1} parent=75 // pred_fallthru
          _
        // Predicated region
        $region97: #{tpu_custom_call.1} parent=75 // pred_check
          %p569 = pneg %p231
        $region98: #{tpu_custom_call.1} parent=75 // pred_check_branch
          %571 = sbr.rel (%p569) target = $region100
        $region99: #{tpu_custom_call.1} parent=75 // pred_region
          %573 = dma.done [#allocation12], 1024
        $region100: #{tpu_custom_call.1} parent=75 // pred_fallthru
          _
        // Predicated region
        $region101: #{tpu_custom_call.1} parent=75 // pred_check
          %p574 = pneg %p273
        $region102: #{tpu_custom_call.1} parent=75 // pred_check_branch
          %576 = sbr.rel (%p574) target = $region104
        $region103: #{tpu_custom_call.1} parent=75 // pred_region
          %578 = dma.done [#allocation12], 1024
        $region104: #{tpu_custom_call.1} parent=75 // pred_fallthru
          _
        // Predicated region
        $region105: #{tpu_custom_call.1} parent=75 // pred_check
          %p579 = pneg %p315
        $region106: #{tpu_custom_call.1} parent=75 // pred_check_branch
          %581 = sbr.rel (%p579) target = $region108
        $region107: #{tpu_custom_call.1} parent=75 // pred_region
          %583 = dma.done [#allocation15], 1024
        $region108: #{tpu_custom_call.1} parent=75 // pred_fallthru
          _
        %s584 = sand.u32 %s45, 1
        %s585 = scalar_lea.sflag [#allocation3], %s584
        %s586 = sand.u32 %s45, 1
        %s587 = smul.addr %s586, 16
        %s588 = scalar_lea.vmem [#allocation2], %s587
        %p589 = pneg %p58
        %p590 = pneg %p55
        %s591 = sand.u32 %s37, 1
        %s592 = scalar_lea.sflag [#allocation6], %s591
        %s593 = sand.u32 %s71, 1
        %s594 = smul.addr %s593, 16
        %s595 = scalar_lea.vmem [#allocation5], %s594
        %p596 = pneg %p84
        %p597 = pneg %p81
        %p598 = pneg %p105
        %p599 = pneg %p102
        %p600 = pneg %p126
        %p601 = pneg %p123
        %p602 = pneg %p147
        %p603 = pneg %p144
        %p604 = pneg %p168
        %p605 = pneg %p165
        %p606 = pneg %p189
        %p607 = pneg %p186
        %p608 = pneg %p210
        %p609 = pneg %p207
        %p610 = pneg %p231
        %p611 = pneg %p228
        %p612 = pneg %p252
        %p613 = pneg %p249
        %p614 = pneg %p273
        %p615 = pneg %p270
        %p616 = pneg %p294
        %p617 = pneg %p291
        %p618 = pneg %p315
        %p619 = pneg %p312
        %p620 = pneg %p336
        %p621 = pneg %p333
        %p622 = pneg %p362
        %p623 = pneg %p359
        %s624 = sand.u32 %s349, 1
        %s625 = scalar_lea.sflag [#allocation4], %s624
        %s626 = sand.u32 %s349, 1
        %s627 = smul.addr %s626, 32
        %s628 = scalar_lea.vmem [#allocation16], %s627
        %v630 = vld [vmem:[%s538] sm:$0xf]
        %v631 = vld [vmem:[%s538 + $0x4] sm:$0xf]
        %v632 = vld [vmem:[%s538 + $0x8] sm:$0xf]
        %v633 = vld [vmem:[%s538 + $0xc] sm:$0xf]
        %v634 = vld [vmem:[%s548] sm:$0xf]
        %v635 = vld [vmem:[%s548 + $0x4] sm:$0xf]
        %v636 = vld [vmem:[%s548 + $0x8] sm:$0xf]
        %v637 = vld [vmem:[%s548 + $0xc] sm:$0xf]
        %v642 = vunpack.c.l.b16 %v630
        %v643 = vunpack.c.l.b16 %v631
        %v644 = vunpack.c.l.b16 %v632
        %v645 = vunpack.c.l.b16 %v633
        %v646 = vpack.c.b16 %v643, %v642
        %v647 = vpack.c.b16 %v645, %v644
        %v652 = vunpack.c.l.b16 %v634
        %v653 = vunpack.c.l.b16 %v635
        %v654 = vunpack.c.l.b16 %v636
        %v655 = vunpack.c.l.b16 %v637
        %v656 = vpack.c.b16 %v653, %v652
        %v657 = vpack.c.b16 %v655, %v654
        %vm660 = vcmask 261120
        %v662 = vsel %vm660, %v646, 0
        %v665 = vsel %vm660, %v647, 0
        %667 = vmatpush.bf16.msra.mxu0 0
        %668 = vmatpush.bf16.msra.mxu0 0
        %669 = vmatpush.bf16.msra.mxu0 0
        %670 = vmatpush.bf16.msra.mxu0 0
        %671 = vmatpush.bf16.msra.mxu0 0
        %672 = vmatpush.bf16.msra.mxu0 0
        %673 = vmatpush.bf16.msra.mxu0 %v657
        %674 = vmatpush.bf16.msra.mxu0 %v656
        %675 = vmatmul.bf16.gmra.mxu0 %v662
        %v676 = vpop.f32.mrf.mxu0
        %v677 = vadd.f32 0.0, %v676
        %v678 = vpop.f32.mrf.mxu0
        %v679 = vadd.f32 0.0, %v678
        %680 = vmatmul.bf16.gmra.mxu0 %v665
        %v681 = vpop.f32.mrf.mxu0
        %v682 = vadd.f32 0.0, %v681
        %v683 = vpop.f32.mrf.mxu0
        %v684 = vadd.f32 0.0, %v683
        %685 = vdwg.mxu0
        %v686 = vpack.c.bf16 %v679, %v677
        %v687 = vpack.c.bf16 %v684, %v682
        %v688 = vld [vmem:[#allocation7] sm:$0xf]
        %v689 = vld [vmem:[#allocation7 + $0x4] sm:$0xf]
        %v690 = vld [vmem:[#allocation7 + $0x8] sm:$0xf]
        %v691 = vld [vmem:[#allocation7 + $0xc] sm:$0xf]
        %v692 = vld [vmem:[#allocation7 + $0x10] sm:$0xf]
        %v693 = vld [vmem:[#allocation7 + $0x14] sm:$0xf]
        %v694 = vld [vmem:[#allocation7 + $0x18] sm:$0xf]
        %v695 = vld [vmem:[#allocation7 + $0x1c] sm:$0xf]
        %v696 = vld [vmem:[#allocation7 + $0x20] sm:$0xf]
        %v697 = vld [vmem:[#allocation7 + $0x24] sm:$0xf]
        %v698 = vld [vmem:[#allocation7 + $0x28] sm:$0xf]
        %v699 = vld [vmem:[#allocation7 + $0x2c] sm:$0xf]
        %v700 = vld [vmem:[#allocation7 + $0x30] sm:$0xf]
        %v701 = vld [vmem:[#allocation7 + $0x34] sm:$0xf]
        %v702 = vld [vmem:[#allocation7 + $0x38] sm:$0xf]
        %v703 = vld [vmem:[#allocation7 + $0x3c] sm:$0xf]
        %v704 = vld [vmem:[%s3] sm:$0x1]
        %v706 = vperm.slane %v704, 0
        %v724 = vunpack.c.l.b16 %v688
        %v725 = vunpack.c.l.b16 %v689
        %v726 = vunpack.c.l.b16 %v690
        %v727 = vunpack.c.l.b16 %v691
        %v728 = vunpack.c.l.b16 %v692
        %v729 = vunpack.c.l.b16 %v693
        %v730 = vunpack.c.l.b16 %v694
        %v731 = vunpack.c.l.b16 %v695
        %v732 = vunpack.c.l.b16 %v696
        %v733 = vunpack.c.l.b16 %v697
        %v734 = vunpack.c.l.b16 %v698
        %v735 = vunpack.c.l.b16 %v699
        %v736 = vunpack.c.l.b16 %v700
        %v737 = vunpack.c.l.b16 %v701
        %v738 = vunpack.c.l.b16 %v702
        %v739 = vunpack.c.l.b16 %v703
        %v740 = vpack.c.b16 %v725, %v724
        %v741 = vpack.c.b16 %v727, %v726
        %v742 = vpack.c.b16 %v729, %v728
        %v743 = vpack.c.b16 %v731, %v730
        %v744 = vpack.c.b16 %v733, %v732
        %v745 = vpack.c.b16 %v735, %v734
        %v746 = vpack.c.b16 %v737, %v736
        %v747 = vpack.c.b16 %v739, %v738
        %756 = vmatpush.bf16.msra.mxu0 %v747
        %757 = vmatpush.bf16.msra.mxu0 %v746
        %758 = vmatpush.bf16.msra.mxu0 %v745
        %759 = vmatpush.bf16.msra.mxu0 %v744
        %760 = vmatpush.bf16.msra.mxu0 %v743
        %761 = vmatpush.bf16.msra.mxu0 %v742
        %762 = vmatpush.bf16.msra.mxu0 %v741
        %763 = vmatpush.bf16.msra.mxu0 %v740
        %764 = vmatmul.bf16.gmra.mxu0 %v686
        %v765 = vpop.f32.mrf.mxu0
        %v766 = vadd.f32 %v706, %v765
        %v767 = vpop.f32.mrf.mxu0
        %v768 = vadd.f32 %v706, %v767
        %769 = vmatmul.bf16.gmra.mxu0 %v687
        %v770 = vpop.f32.mrf.mxu0
        %v771 = vadd.f32 %v706, %v770
        %v772 = vpop.f32.mrf.mxu0
        %v773 = vadd.f32 %v706, %v772
        %774 = vdwg.mxu0
        %v775 = vmax.f32 %v766, 0.0
        %v776 = vmax.f32 %v768, 0.0
        %v777 = vmax.f32 %v771, 0.0
        %v778 = vmax.f32 %v773, 0.0
        %v779 = vpack.c.bf16 %v776, %v775
        %v780 = vpack.c.bf16 %v778, %v777
        %v781 = vld [vmem:[#allocation8] sm:$0xf]
        %v782 = vld [vmem:[#allocation8 + $0x4] sm:$0xf]
        %v783 = vld [vmem:[#allocation8 + $0x8] sm:$0xf]
        %v784 = vld [vmem:[#allocation8 + $0xc] sm:$0xf]
        %v785 = vld [vmem:[#allocation8 + $0x10] sm:$0xf]
        %v786 = vld [vmem:[#allocation8 + $0x14] sm:$0xf]
        %v787 = vld [vmem:[#allocation8 + $0x18] sm:$0xf]
        %v788 = vld [vmem:[#allocation8 + $0x1c] sm:$0xf]
        %v789 = vld [vmem:[#allocation8 + $0x20] sm:$0xf]
        %v790 = vld [vmem:[#allocation8 + $0x24] sm:$0xf]
        %v791 = vld [vmem:[#allocation8 + $0x28] sm:$0xf]
        %v792 = vld [vmem:[#allocation8 + $0x2c] sm:$0xf]
        %v793 = vld [vmem:[#allocation8 + $0x30] sm:$0xf]
        %v794 = vld [vmem:[#allocation8 + $0x34] sm:$0xf]
        %v795 = vld [vmem:[#allocation8 + $0x38] sm:$0xf]
        %v796 = vld [vmem:[#allocation8 + $0x3c] sm:$0xf]
        %v797 = vld [vmem:[%s5] sm:$0x1]
        %v799 = vperm.slane %v797, 0
        %v817 = vunpack.c.l.b16 %v781
        %v818 = vunpack.c.l.b16 %v782
        %v819 = vunpack.c.l.b16 %v783
        %v820 = vunpack.c.l.b16 %v784
        %v821 = vunpack.c.l.b16 %v785
        %v822 = vunpack.c.l.b16 %v786
        %v823 = vunpack.c.l.b16 %v787
        %v824 = vunpack.c.l.b16 %v788
        %v825 = vunpack.c.l.b16 %v789
        %v826 = vunpack.c.l.b16 %v790
        %v827 = vunpack.c.l.b16 %v791
        %v828 = vunpack.c.l.b16 %v792
        %v829 = vunpack.c.l.b16 %v793
        %v830 = vunpack.c.l.b16 %v794
        %v831 = vunpack.c.l.b16 %v795
        %v832 = vunpack.c.l.b16 %v796
        %v833 = vpack.c.b16 %v818, %v817
        %v834 = vpack.c.b16 %v820, %v819
        %v835 = vpack.c.b16 %v822, %v821
        %v836 = vpack.c.b16 %v824, %v823
        %v837 = vpack.c.b16 %v826, %v825
        %v838 = vpack.c.b16 %v828, %v827
        %v839 = vpack.c.b16 %v830, %v829
        %v840 = vpack.c.b16 %v832, %v831
        %849 = vmatpush.bf16.msra.mxu0 %v840
        %850 = vmatpush.bf16.msra.mxu0 %v839
        %851 = vmatpush.bf16.msra.mxu0 %v838
        %852 = vmatpush.bf16.msra.mxu0 %v837
        %853 = vmatpush.bf16.msra.mxu0 %v836
        %854 = vmatpush.bf16.msra.mxu0 %v835
        %855 = vmatpush.bf16.msra.mxu0 %v834
        %856 = vmatpush.bf16.msra.mxu0 %v833
        %857 = vmatmul.bf16.gmra.mxu0 %v779
        %v858 = vpop.f32.mrf.mxu0
        %v859 = vadd.f32 %v799, %v858
        %v860 = vpop.f32.mrf.mxu0
        %v861 = vadd.f32 %v799, %v860
        %862 = vmatmul.bf16.gmra.mxu0 %v780
        %v863 = vpop.f32.mrf.mxu0
        %v864 = vadd.f32 %v799, %v863
        %v865 = vpop.f32.mrf.mxu0
        %v866 = vadd.f32 %v799, %v865
        %867 = vdwg.mxu0
        %v868 = vmax.f32 %v859, 0.0
        %v869 = vmax.f32 %v861, 0.0
        %v870 = vmax.f32 %v864, 0.0
        %v871 = vmax.f32 %v866, 0.0
        %v872 = vpack.c.bf16 %v869, %v868
        %v873 = vpack.c.bf16 %v871, %v870
        %874 = vmatpush.bf16.msra.mxu0 0
        %875 = vmatpush.bf16.msra.mxu0 0
        %876 = vmatpush.bf16.msra.mxu0 0
        %877 = vmatpush.bf16.msra.mxu0 0
        %878 = vmatpush.bf16.msra.mxu0 0
        %879 = vmatpush.bf16.msra.mxu0 0
        %880 = vmatpush.bf16.msra.mxu0 %v873
        %881 = vmatpush.bf16.msra.mxu0 %v872
        %882 = vmatmul.bf16.gmra.mxu0 %v662
        %v883 = vpop.f32.mrf.mxu0
        %v884 = vadd.f32 0.0, %v883
        %v885 = vpop.f32.mrf.mxu0
        %v886 = vadd.f32 0.0, %v885
        %887 = vmatmul.bf16.gmra.mxu0 %v665
        %v888 = vpop.f32.mrf.mxu0
        %v889 = vadd.f32 0.0, %v888
        %v890 = vpop.f32.mrf.mxu0
        %v891 = vadd.f32 0.0, %v890
        %892 = vdwg.mxu0
        %v893 = vpack.c.bf16 %v886, %v884
        %v894 = vpack.c.bf16 %v891, %v889
        %v895 = vld [vmem:[#allocation10] sm:$0xf]
        %v896 = vld [vmem:[#allocation10 + $0x4] sm:$0xf]
        %v897 = vld [vmem:[#allocation10 + $0x8] sm:$0xf]
        %v898 = vld [vmem:[#allocation10 + $0xc] sm:$0xf]
        %v899 = vld [vmem:[#allocation10 + $0x10] sm:$0xf]
        %v900 = vld [vmem:[#allocation10 + $0x14] sm:$0xf]
        %v901 = vld [vmem:[#allocation10 + $0x18] sm:$0xf]
        %v902 = vld [vmem:[#allocation10 + $0x1c] sm:$0xf]
        %v903 = vld [vmem:[#allocation10 + $0x20] sm:$0xf]
        %v904 = vld [vmem:[#allocation10 + $0x24] sm:$0xf]
        %v905 = vld [vmem:[#allocation10 + $0x28] sm:$0xf]
        %v906 = vld [vmem:[#allocation10 + $0x2c] sm:$0xf]
        %v907 = vld [vmem:[#allocation10 + $0x30] sm:$0xf]
        %v908 = vld [vmem:[#allocation10 + $0x34] sm:$0xf]
        %v909 = vld [vmem:[#allocation10 + $0x38] sm:$0xf]
        %v910 = vld [vmem:[#allocation10 + $0x3c] sm:$0xf]
        %v911 = vld [vmem:[%s7] sm:$0x1]
        %v913 = vperm.slane %v911, 0
        %v931 = vunpack.c.l.b16 %v895
        %v932 = vunpack.c.l.b16 %v896
        %v933 = vunpack.c.l.b16 %v897
        %v934 = vunpack.c.l.b16 %v898
        %v935 = vunpack.c.l.b16 %v899
        %v936 = vunpack.c.l.b16 %v900
        %v937 = vunpack.c.l.b16 %v901
        %v938 = vunpack.c.l.b16 %v902
        %v939 = vunpack.c.l.b16 %v903
        %v940 = vunpack.c.l.b16 %v904
        %v941 = vunpack.c.l.b16 %v905
        %v942 = vunpack.c.l.b16 %v906
        %v943 = vunpack.c.l.b16 %v907
        %v944 = vunpack.c.l.b16 %v908
        %v945 = vunpack.c.l.b16 %v909
        %v946 = vunpack.c.l.b16 %v910
        %v947 = vpack.c.b16 %v932, %v931
        %v948 = vpack.c.b16 %v934, %v933
        %v949 = vpack.c.b16 %v936, %v935
        %v950 = vpack.c.b16 %v938, %v937
        %v951 = vpack.c.b16 %v940, %v939
        %v952 = vpack.c.b16 %v942, %v941
        %v953 = vpack.c.b16 %v944, %v943
        %v954 = vpack.c.b16 %v946, %v945
        %963 = vmatpush.bf16.msra.mxu0 %v954
        %964 = vmatpush.bf16.msra.mxu0 %v953
        %965 = vmatpush.bf16.msra.mxu0 %v952
        %966 = vmatpush.bf16.msra.mxu0 %v951
        %967 = vmatpush.bf16.msra.mxu0 %v950
        %968 = vmatpush.bf16.msra.mxu0 %v949
        %969 = vmatpush.bf16.msra.mxu0 %v948
        %970 = vmatpush.bf16.msra.mxu0 %v947
        %971 = vmatmul.bf16.gmra.mxu0 %v893
        %v972 = vpop.f32.mrf.mxu0
        %v973 = vadd.f32 %v913, %v972
        %v974 = vpop.f32.mrf.mxu0
        %v975 = vadd.f32 %v913, %v974
        %976 = vmatmul.bf16.gmra.mxu0 %v894
        %v977 = vpop.f32.mrf.mxu0
        %v978 = vadd.f32 %v913, %v977
        %v979 = vpop.f32.mrf.mxu0
        %v980 = vadd.f32 %v913, %v979
        %981 = vdwg.mxu0
        %v982 = vmax.f32 %v973, 0.0
        %v983 = vmax.f32 %v975, 0.0
        %v984 = vmax.f32 %v978, 0.0
        %v985 = vmax.f32 %v980, 0.0
        %v986 = vpack.c.bf16 %v983, %v982
        %v987 = vpack.c.bf16 %v985, %v984
        %v988 = vld [vmem:[#allocation11] sm:$0xf]
        %v989 = vld [vmem:[#allocation11 + $0x4] sm:$0xf]
        %v990 = vld [vmem:[#allocation11 + $0x8] sm:$0xf]
        %v991 = vld [vmem:[#allocation11 + $0xc] sm:$0xf]
        %v992 = vld [vmem:[#allocation11 + $0x10] sm:$0xf]
        %v993 = vld [vmem:[#allocation11 + $0x14] sm:$0xf]
        %v994 = vld [vmem:[#allocation11 + $0x18] sm:$0xf]
        %v995 = vld [vmem:[#allocation11 + $0x1c] sm:$0xf]
        %v996 = vld [vmem:[#allocation11 + $0x20] sm:$0xf]
        %v997 = vld [vmem:[#allocation11 + $0x24] sm:$0xf]
        %v998 = vld [vmem:[#allocation11 + $0x28] sm:$0xf]
        %v999 = vld [vmem:[#allocation11 + $0x2c] sm:$0xf]
        %v1000 = vld [vmem:[#allocation11 + $0x30] sm:$0xf]
        %v1001 = vld [vmem:[#allocation11 + $0x34] sm:$0xf]
        %v1002 = vld [vmem:[#allocation11 + $0x38] sm:$0xf]
        %v1003 = vld [vmem:[#allocation11 + $0x3c] sm:$0xf]
        %v1004 = vld [vmem:[%s9] sm:$0x1]
        %v1006 = vperm.slane %v1004, 0
        %v1024 = vunpack.c.l.b16 %v988
        %v1025 = vunpack.c.l.b16 %v989
        %v1026 = vunpack.c.l.b16 %v990
        %v1027 = vunpack.c.l.b16 %v991
        %v1028 = vunpack.c.l.b16 %v992
        %v1029 = vunpack.c.l.b16 %v993
        %v1030 = vunpack.c.l.b16 %v994
        %v1031 = vunpack.c.l.b16 %v995
        %v1032 = vunpack.c.l.b16 %v996
        %v1033 = vunpack.c.l.b16 %v997
        %v1034 = vunpack.c.l.b16 %v998
        %v1035 = vunpack.c.l.b16 %v999
        %v1036 = vunpack.c.l.b16 %v1000
        %v1037 = vunpack.c.l.b16 %v1001
        %v1038 = vunpack.c.l.b16 %v1002
        %v1039 = vunpack.c.l.b16 %v1003
        %v1040 = vpack.c.b16 %v1025, %v1024
        %v1041 = vpack.c.b16 %v1027, %v1026
        %v1042 = vpack.c.b16 %v1029, %v1028
        %v1043 = vpack.c.b16 %v1031, %v1030
        %v1044 = vpack.c.b16 %v1033, %v1032
        %v1045 = vpack.c.b16 %v1035, %v1034
        %v1046 = vpack.c.b16 %v1037, %v1036
        %v1047 = vpack.c.b16 %v1039, %v1038
        %1056 = vmatpush.bf16.msra.mxu0 %v1047
        %1057 = vmatpush.bf16.msra.mxu0 %v1046
        %1058 = vmatpush.bf16.msra.mxu0 %v1045
        %1059 = vmatpush.bf16.msra.mxu0 %v1044
        %1060 = vmatpush.bf16.msra.mxu0 %v1043
        %1061 = vmatpush.bf16.msra.mxu0 %v1042
        %1062 = vmatpush.bf16.msra.mxu0 %v1041
        %1063 = vmatpush.bf16.msra.mxu0 %v1040
        %1064 = vmatmul.bf16.gmra.mxu0 %v986
        %v1065 = vpop.f32.mrf.mxu0
        %v1066 = vadd.f32 %v1006, %v1065
        %v1067 = vpop.f32.mrf.mxu0
        %v1068 = vadd.f32 %v1006, %v1067
        %1069 = vmatmul.bf16.gmra.mxu0 %v987
        %v1070 = vpop.f32.mrf.mxu0
        %v1071 = vadd.f32 %v1006, %v1070
        %v1072 = vpop.f32.mrf.mxu0
        %v1073 = vadd.f32 %v1006, %v1072
        %1074 = vdwg.mxu0
        %v1075 = vmax.f32 %v1066, 0.0
        %v1076 = vmax.f32 %v1068, 0.0
        %v1077 = vmax.f32 %v1071, 0.0
        %v1078 = vmax.f32 %v1073, 0.0
        %v1079 = vpack.c.bf16 %v1076, %v1075
        %v1080 = vpack.c.bf16 %v1078, %v1077
        %v1081 = vld [vmem:[#allocation13] sm:$0xf]
        %v1082 = vld [vmem:[#allocation13 + $0x4] sm:$0xf]
        %v1083 = vld [vmem:[#allocation13 + $0x8] sm:$0xf]
        %v1084 = vld [vmem:[#allocation13 + $0xc] sm:$0xf]
        %v1085 = vld [vmem:[#allocation13 + $0x10] sm:$0xf]
        %v1086 = vld [vmem:[#allocation13 + $0x14] sm:$0xf]
        %v1087 = vld [vmem:[#allocation13 + $0x18] sm:$0xf]
        %v1088 = vld [vmem:[#allocation13 + $0x1c] sm:$0xf]
        %v1089 = vld [vmem:[#allocation13 + $0x20] sm:$0xf]
        %v1090 = vld [vmem:[#allocation13 + $0x24] sm:$0xf]
        %v1091 = vld [vmem:[#allocation13 + $0x28] sm:$0xf]
        %v1092 = vld [vmem:[#allocation13 + $0x2c] sm:$0xf]
        %v1093 = vld [vmem:[#allocation13 + $0x30] sm:$0xf]
        %v1094 = vld [vmem:[#allocation13 + $0x34] sm:$0xf]
        %v1095 = vld [vmem:[#allocation13 + $0x38] sm:$0xf]
        %v1096 = vld [vmem:[#allocation13 + $0x3c] sm:$0xf]
        %v1097 = vld [vmem:[%s11] sm:$0x1]
        %v1099 = vperm.slane %v1097, 0
        %v1117 = vunpack.c.l.b16 %v1081
        %v1118 = vunpack.c.l.b16 %v1082
        %v1119 = vunpack.c.l.b16 %v1083
        %v1120 = vunpack.c.l.b16 %v1084
        %v1121 = vunpack.c.l.b16 %v1085
        %v1122 = vunpack.c.l.b16 %v1086
        %v1123 = vunpack.c.l.b16 %v1087
        %v1124 = vunpack.c.l.b16 %v1088
        %v1125 = vunpack.c.l.b16 %v1089
        %v1126 = vunpack.c.l.b16 %v1090
        %v1127 = vunpack.c.l.b16 %v1091
        %v1128 = vunpack.c.l.b16 %v1092
        %v1129 = vunpack.c.l.b16 %v1093
        %v1130 = vunpack.c.l.b16 %v1094
        %v1131 = vunpack.c.l.b16 %v1095
        %v1132 = vunpack.c.l.b16 %v1096
        %v1133 = vpack.c.b16 %v1118, %v1117
        %v1134 = vpack.c.b16 %v1120, %v1119
        %v1135 = vpack.c.b16 %v1122, %v1121
        %v1136 = vpack.c.b16 %v1124, %v1123
        %v1137 = vpack.c.b16 %v1126, %v1125
        %v1138 = vpack.c.b16 %v1128, %v1127
        %v1139 = vpack.c.b16 %v1130, %v1129
        %v1140 = vpack.c.b16 %v1132, %v1131
        %1149 = vmatpush.bf16.msra.mxu0 %v1140
        %1150 = vmatpush.bf16.msra.mxu0 %v1139
        %1151 = vmatpush.bf16.msra.mxu0 %v1138
        %1152 = vmatpush.bf16.msra.mxu0 %v1137
        %1153 = vmatpush.bf16.msra.mxu0 %v1136
        %1154 = vmatpush.bf16.msra.mxu0 %v1135
        %1155 = vmatpush.bf16.msra.mxu0 %v1134
        %1156 = vmatpush.bf16.msra.mxu0 %v1133
        %1157 = vmatmul.bf16.gmra.mxu0 %v1079
        %v1158 = vpop.f32.mrf.mxu0
        %v1159 = vadd.f32 %v1099, %v1158
        %v1160 = vpop.f32.mrf.mxu0
        %v1161 = vadd.f32 %v1099, %v1160
        %1162 = vmatmul.bf16.gmra.mxu0 %v1080
        %v1163 = vpop.f32.mrf.mxu0
        %v1164 = vadd.f32 %v1099, %v1163
        %v1165 = vpop.f32.mrf.mxu0
        %v1166 = vadd.f32 %v1099, %v1165
        %1167 = vdwg.mxu0
        %v1168 = vmax.f32 %v1159, 0.0
        %v1169 = vmax.f32 %v1161, 0.0
        %v1170 = vmax.f32 %v1164, 0.0
        %v1171 = vmax.f32 %v1166, 0.0
        %v1172 = vpack.c.bf16 %v1169, %v1168
        %v1173 = vpack.c.bf16 %v1171, %v1170
        %v1174 = vld [vmem:[#allocation14] sm:$0xf]
        %v1175 = vld [vmem:[#allocation14 + $0x4] sm:$0xf]
        %v1176 = vld [vmem:[#allocation14 + $0x8] sm:$0xf]
        %v1177 = vld [vmem:[#allocation14 + $0xc] sm:$0xf]
        %v1178 = vld [vmem:[#allocation14 + $0x10] sm:$0xf]
        %v1179 = vld [vmem:[#allocation14 + $0x14] sm:$0xf]
        %v1180 = vld [vmem:[#allocation14 + $0x18] sm:$0xf]
        %v1181 = vld [vmem:[#allocation14 + $0x1c] sm:$0xf]
        %v1182 = vld [vmem:[#allocation14 + $0x20] sm:$0xf]
        %v1183 = vld [vmem:[#allocation14 + $0x24] sm:$0xf]
        %v1184 = vld [vmem:[#allocation14 + $0x28] sm:$0xf]
        %v1185 = vld [vmem:[#allocation14 + $0x2c] sm:$0xf]
        %v1186 = vld [vmem:[#allocation14 + $0x30] sm:$0xf]
        %v1187 = vld [vmem:[#allocation14 + $0x34] sm:$0xf]
        %v1188 = vld [vmem:[#allocation14 + $0x38] sm:$0xf]
        %v1189 = vld [vmem:[#allocation14 + $0x3c] sm:$0xf]
        %v1190 = vld [vmem:[%s13] sm:$0x1]
        %v1192 = vperm.slane %v1190, 0
        %v1210 = vunpack.c.l.b16 %v1174
        %v1211 = vunpack.c.l.b16 %v1175
        %v1212 = vunpack.c.l.b16 %v1176
        %v1213 = vunpack.c.l.b16 %v1177
        %v1214 = vunpack.c.l.b16 %v1178
        %v1215 = vunpack.c.l.b16 %v1179
        %v1216 = vunpack.c.l.b16 %v1180
        %v1217 = vunpack.c.l.b16 %v1181
        %v1218 = vunpack.c.l.b16 %v1182
        %v1219 = vunpack.c.l.b16 %v1183
        %v1220 = vunpack.c.l.b16 %v1184
        %v1221 = vunpack.c.l.b16 %v1185
        %v1222 = vunpack.c.l.b16 %v1186
        %v1223 = vunpack.c.l.b16 %v1187
        %v1224 = vunpack.c.l.b16 %v1188
        %v1225 = vunpack.c.l.b16 %v1189
        %v1226 = vpack.c.b16 %v1211, %v1210
        %v1227 = vpack.c.b16 %v1213, %v1212
        %v1228 = vpack.c.b16 %v1215, %v1214
        %v1229 = vpack.c.b16 %v1217, %v1216
        %v1230 = vpack.c.b16 %v1219, %v1218
        %v1231 = vpack.c.b16 %v1221, %v1220
        %v1232 = vpack.c.b16 %v1223, %v1222
        %v1233 = vpack.c.b16 %v1225, %v1224
        %1242 = vmatpush.bf16.msra.mxu0 %v1233
        %1243 = vmatpush.bf16.msra.mxu0 %v1232
        %1244 = vmatpush.bf16.msra.mxu0 %v1231
        %1245 = vmatpush.bf16.msra.mxu0 %v1230
        %1246 = vmatpush.bf16.msra.mxu0 %v1229
        %1247 = vmatpush.bf16.msra.mxu0 %v1228
        %1248 = vmatpush.bf16.msra.mxu0 %v1227
        %1249 = vmatpush.bf16.msra.mxu0 %v1226
        %1250 = vmatmul.bf16.gmra.mxu0 %v1172
        %v1251 = vpop.f32.mrf.mxu0
        %v1252 = vadd.f32 %v1192, %v1251
        %v1253 = vpop.f32.mrf.mxu0
        %v1254 = vadd.f32 %v1192, %v1253
        %1255 = vmatmul.bf16.gmra.mxu0 %v1173
        %v1256 = vpop.f32.mrf.mxu0
        %v1257 = vadd.f32 %v1192, %v1256
        %v1258 = vpop.f32.mrf.mxu0
        %v1259 = vadd.f32 %v1192, %v1258
        %1260 = vdwg.mxu0
        %v1261 = vlaneseq
        %v1262 = vand.u32 %v1261, 127
        %vm1263 = vcmp.lt.s32.totalorder %v1262, 8
        %v1264 = vsel %vm1263, %v1252, -1e+30
        %v1265 = vsel %vm1263, %v1254, -1e+30
        %v1266 = vsel %vm1263, %v1257, -1e+30
        %v1267 = vsel %vm1263, %v1259, -1e+30
        %1268 = vmax.xlane.f32.xlu0 %v1264
        %v1269 = vpop.xlane.xlu0 %1268
        %1270 = vmax.xlane.f32.xlu0 %v1265
        %v1271 = vpop.xlane.xlu0 %1270
        %1272 = vmax.xlane.f32.xlu0 %v1266
        %v1273 = vpop.xlane.xlu0 %1272
        %1274 = vmax.xlane.f32.xlu0 %v1267
        %v1275 = vpop.xlane.xlu0 %1274
        %v1276 = vsub.f32 %v1264, %v1269
        %v1277 = vsub.f32 %v1265, %v1271
        %v1278 = vsub.f32 %v1266, %v1273
        %v1279 = vsub.f32 %v1267, %v1275
        %v1280 = vmul.f32 %v1276, 1.442695
        %v1281 = vpow.pop %v1280
        %v1282 = vmul.f32 %v1277, 1.442695
        %v1283 = vpow.pop %v1282
        %v1284 = vmul.f32 %v1278, 1.442695
        %v1285 = vpow.pop %v1284
        %v1286 = vmul.f32 %v1279, 1.442695
        %v1287 = vpow.pop %v1286
        %v1288 = vsel %vm1263, %v1281, 0.0
        %v1289 = vsel %vm1263, %v1283, 0.0
        %v1290 = vsel %vm1263, %v1285, 0.0
        %v1291 = vsel %vm1263, %v1287, 0.0
        %1292 = vadd.xlane.f32.xlu0 %v1288
        %v1293 = vpop.xlane.xlu0 %1292
        %1294 = vadd.xlane.f32.xlu0 %v1289
        %v1295 = vpop.xlane.xlu0 %1294
        %1296 = vadd.xlane.f32.xlu0 %v1290
        %v1297 = vpop.xlane.xlu0 %1296
        %1298 = vadd.xlane.f32.xlu0 %v1291
        %v1299 = vpop.xlane.xlu0 %1298
        %v1300 = vlog2.pop %v1293
        %v1301 = vmul.f32 %v1300, 0.6931472
        %v1302 = vlog2.pop %v1295
        %v1303 = vmul.f32 %v1302, 0.6931472
        %v1304 = vlog2.pop %v1297
        %v1305 = vmul.f32 %v1304, 0.6931472
        %v1306 = vlog2.pop %v1299
        %v1307 = vmul.f32 %v1306, 0.6931472
        %v1308 = vsub.f32 %v1276, %v1301
        %v1309 = vsub.f32 %v1277, %v1303
        %v1310 = vsub.f32 %v1278, %v1305
        %v1311 = vsub.f32 %v1279, %v1307
        %v1312 = vsel %vm1263, %v1308, 0.0
        %v1313 = vsel %vm1263, %v1309, 0.0
        %v1314 = vsel %vm1263, %v1310, 0.0
        %v1315 = vsel %vm1263, %v1311, 0.0
        %1316 = vst [vmem:[%s628] sm:$0xff] %v1312
        %1317 = vst [vmem:[%s628 + $0x8] sm:$0xff] %v1313
        %1318 = vst [vmem:[%s628 + $0x10] sm:$0xff] %v1314
        %1319 = vst [vmem:[%s628 + $0x18] sm:$0xff] %v1315
        %s1320 = sand.u32 %s349, 1
        %s1321 = scalar_lea.sflag [#allocation4], %s1320
        %s1322 = sand.u32 %s349, 1
        %s1323 = smul.addr %s1322, 32
        %s1324 = scalar_lea.vmem [#allocation16], %s1323
        // Predicated region
        $region109: #{tpu_custom_call.1} parent=75 // pred_check
          %p1325 = pneg %p359
        $region110: #{tpu_custom_call.1} parent=75 // pred_check_branch
          %1327 = sbr.rel (%p1325) target = $region112
        $region111: #{tpu_custom_call.1} parent=75 // pred_region
          %1329 = vsyncadd %s1321, 0
          %s1330 = smul.addr %s37, 4
          %s1331 = smul.addr %s1330, 8
          %s1332 = scalar_lea.hbm %s14, %s1331
          %s1333 = sshll.u32 %s1324, 4
          %s1334 = int_to_ptr.vmem [resolvable:$true] %s1333
          %s1335 = sshll.u32 %s1332, 4
          %s1336 = int_to_ptr.hbm [resolvable:$true] %s1335
          %1341 = dma.vmem_to_hbm [thread:$0]  %s1334, 512, %s1336, %s1321, 128, 128, 8
        $region112: #{tpu_custom_call.1} parent=75 // pred_fallthru
          _
      $region76: #{tpu_custom_call.1} parent=5 // pred_fallthru
        _
      %p1342 = scmp.le.s32.totalorder 2, %s32
      // Predicated region
      $region113: #{tpu_custom_call.1} parent=5 // pred_check
        %p1343 = pneg %p1342
      $region114: #{tpu_custom_call.1} parent=5 // pred_check_branch
        %1345 = sbr.rel (%p1343) target = $region116
      $region115: #{tpu_custom_call.1} parent=5 // pred_region
        %s1346 = ssub.s32 %s32, 2
        // Predicated region
        $region117: #{tpu_custom_call.1} parent=115 // pred_check
          %p1347 = pneg %p365
        $region118: #{tpu_custom_call.1} parent=115 // pred_check_branch
          %1349 = sbr.rel (%p1347) target = $region120
        $region119: #{tpu_custom_call.1} parent=115 // pred_region
          %s1350 = sand.u32 %s350, 1
          %s1351 = scalar_lea.sflag [#allocation4], %s1350
          %s1352 = sand.u32 %s350, 1
          %s1353 = smul.addr %s1352, 32
          %s1354 = scalar_lea.vmem [#allocation16], %s1353
          %1356 = dma.done %s1351, 512
        $region120: #{tpu_custom_call.1} parent=115 // pred_fallthru
          _
      $region116: #{tpu_custom_call.1} parent=5 // pred_fallthru
        _
    $region6: #{tpu_custom_call.1} parent=1 // loop_footer
      %s36 = sadd.s32 1, %s32
    $region7: #{tpu_custom_call.1} parent=1 // loop_footer_branch
      %31 = sbr.rel target = $region3
    $region8: #{tpu_custom_call.1} parent=1 // loop_exit
      _
    %1357 = vsyncpa [#allocation3], 1
    %s1358 = scalar_lea.sflag [#allocation3], 1
    %1359 = vsyncpa %s1358, 1
    %1360 = vsyncpa [#allocation6], 1
    %s1361 = scalar_lea.sflag [#allocation6], 1
    %1362 = vsyncpa %s1361, 1
    %1363 = vsyncpa [#allocation9], 1
    %1364 = vsyncpa [#allocation12], 1
    %1365 = vsyncpa [#allocation15], 1
    %1366 = vsyncpa [#allocation4], 1
    %s1367 = scalar_lea.sflag [#allocation4], 1
    %1368 = vsyncpa %s1367, 1

</llo_original>
